<compile_context>
chip_gen: v6e
topology: v6e:2x2x1
jax: 0.10.0
libtpu: 0.0.40
codegen_flags: <defaults>
</compile_context>

<pallas_src>
import functools

import numpy as np
import jax
import jax.numpy as jnp
from jax.experimental import pallas as pl
from jax.experimental.pallas import tpu as pltpu

BN_EPS = 1e-5


# ----------------------------- wrapper-side weight plumbing ----------------------------------
def _shift_matrix(n_in, n_out, offset):
    """M[w + offset, w] = 1 (rows outside [0, n_in) dropped)."""
    m = np.zeros((n_in, n_out), np.float32)
    for w in range(n_out):
        r = w + offset
        if 0 <= r < n_in:
            m[r, w] = 1.0
    return jnp.asarray(m)


def _toeplitz_3x3(w_hwio, W, in_padded):
    """(3,3,Ci,Co) HWIO weights -> list of 3 (Lin, W*Co) Toeplitz-along-W matrices (one per dy).

    in_padded=True : input lanes are (W+2)*Ci (explicit W halo); output col w taps cols w..w+2.
    in_padded=False: input lanes are W*Ci (no W halo); taps at w+dx-1, out-of-range taps dropped
                     (they would multiply zero padding anyway)."""
    _, _, Ci, Co = w_hwio.shape
    mats = []
    for dy in range(3):
        acc = None
        for dx in range(3):
            e = _shift_matrix(W + 2, W, dx) if in_padded else _shift_matrix(W, W, dx - 1)
            t = jnp.kron(e, w_hwio[dy, dx])            # (Lin, W*Co)
            acc = t if acc is None else acc + t
        mats.append(acc)
    return mats


# ---------------------------------- fused ResBlock kernel ------------------------------------
def _resblock_kernel(B, H, W, Cin, Cout,
                     xim_ref, xmid_ref, t1_ref, t2_ref, ts_ref,
                     s_ref, st_ref, mtop_ref, mbot_ref,
                     g1_ref, b1_ref, g2_ref, b2_ref, gs_ref, bs_ref,
                     out_ref):
    f32 = jnp.float32
    BH = B * H
    inv_nhw = 1.0 / float(B * H * W)

    s = s_ref[...]        # (W*Cout, Cout)   channel-grouping matrix
    st = st_ref[...]      # (Cout, W*Cout)   channel -> lane broadcast matrix

    def bn(acc, g, b):
        # training-mode BatchNorm over (N, H, W), biased variance, ONE-pass stats, lane-dense.
        rowch = jnp.dot(acc, s, preferred_element_type=f32)            # (BH, C) per-row ch sums
        rowch2 = jnp.dot(acc * acc, s, preferred_element_type=f32)     # (BH, C) per-row ch sumsq
        mean_c = jnp.sum(rowch, axis=0, keepdims=True) * inv_nhw       # (1, C)
        ex2_c = jnp.sum(rowch2, axis=0, keepdims=True) * inv_nhw       # (1, C)
        var_c = ex2_c - mean_c * mean_c
        inv_c = jax.lax.rsqrt(var_c + BN_EPS)                          # (1, C)
        a_c = inv_c * g                                                # (1, C)
        c_c = b - mean_c * a_c                                         # (1, C)
        a_full = jnp.dot(a_c, st, preferred_element_type=f32)          # (1, W*C)
        c_full = jnp.dot(c_c, st, preferred_element_type=f32)          # (1, W*C)
        return acc * a_full + c_full                                   # sublane-broadcast rows

    # ---- conv1: one fat matmul over the wrapper-built dy-im2col slab --------------------------
    acc1 = jnp.dot(xim_ref[...], t1_ref[...], preferred_element_type=f32)   # (BH, W*Cout)
    y1 = jnp.maximum(bn(acc1, g1_ref[...], b1_ref[...]), 0.0)

    # ---- conv2 + BN (left branch): sublane rolls + batch-boundary masks, no halo scratch ------
    y_top = pltpu.roll(y1, 1, 0) * mtop_ref[...]        # row r sees y1[r-1]; zero at h == 0
    y_bot = pltpu.roll(y1, BH - 1, 0) * mbot_ref[...]   # row r sees y1[r+1]; zero at h == H-1
    acc2 = jnp.dot(y_top, t2_ref[0], preferred_element_type=f32)
    acc2 = acc2 + jnp.dot(y1, t2_ref[1], preferred_element_type=f32)
    acc2 = acc2 + jnp.dot(y_bot, t2_ref[2], preferred_element_type=f32)
    left = bn(acc2, g2_ref[...], b2_ref[...])

    # ---- shortcut: 1x1 conv (block-diagonal Toeplitz) + BN -------------------------------------
    accs = jnp.dot(xmid_ref[...], ts_ref[...], preferred_element_type=f32)
    short = bn(accs, gs_ref[...], bs_ref[...])

    out_ref[...] = jnp.maximum(left + short, 0.0)


# -------------------------------------- Pallas wrapper ---------------------------------------
def resblock_forward(x, w1, g1, b1, w2, g2, b2, ws, gs, bs):
    """x: (B,H,W,Cin) NHWC f32. w1:(3,3,Cin,Cout), w2:(3,3,Cout,Cout), ws:(1,1,Cin,Cout). stride=1."""
    B, H, W, Cin = x.shape
    Cout = w1.shape[-1]
    BH = B * H
    WC = W * Cout
    f32 = jnp.float32

    # dy-im2col in the wrapper: conv1 input is (BH, 3*(W+2)*Cin); shortcut input is (BH, W*Cin).
    xp = jnp.pad(x, ((0, 0), (1, 1), (1, 1), (0, 0)))                       # (B, H+2, W+2, Cin)
    slabs = [xp[:, dy:dy + H].reshape(BH, (W + 2) * Cin) for dy in range(3)]
    xim = jnp.concatenate(slabs, axis=1)                                    # (BH, 3*(W+2)*Cin)
    xmid = x.reshape(BH, W * Cin)                                           # (BH, W*Cin)

    # Toeplitz-along-W conv weights
    t1 = jnp.concatenate(_toeplitz_3x3(w1, W, in_padded=True), axis=0)      # (3*(W+2)*Cin, WC)
    t2 = jnp.stack(_toeplitz_3x3(w2, W, in_padded=False), axis=0)           # (3, WC, WC)
    ts = jnp.kron(jnp.eye(W, dtype=f32), ws[0, 0])                          # (W*Cin, WC)

    # channel-grouping / channel-broadcast matrices for lane-dense BN stats
    s_mat = jnp.tile(jnp.eye(Cout, dtype=f32), (W, 1))                      # (WC, Cout)
    st_mat = jnp.tile(jnp.eye(Cout, dtype=f32), (1, W))                     # (Cout, WC)

    # batch-boundary row masks for the sublane rolls feeding conv2
    hh = np.arange(BH) % H
    mtop = jnp.asarray((hh != 0).astype(np.float32).reshape(BH, 1))
    mbot = jnp.asarray((hh != H - 1).astype(np.float32).reshape(BH, 1))

    g1c, b1c, g2c, b2c, gsc, bsc = (p.reshape(1, Cout).astype(f32)
                                    for p in (g1, b1, g2, b2, gs, bs))

    kernel = functools.partial(_resblock_kernel, B, H, W, Cin, Cout)
    inputs = (xim, xmid, t1, t2, ts, s_mat, st_mat, mtop, mbot,
              g1c, b1c, g2c, b2c, gsc, bsc)

    # Single invocation, no grid: every operand is a full VMEM-resident block (tiny at this size),
    # nothing to pipeline, no double-buffering of the Toeplitz weights.
    out2d = pl.pallas_call(
        kernel,
        out_shape=jax.ShapeDtypeStruct((BH, WC), f32),
    )(*inputs)

    # (B*H, W*Cout) lane-dense result -> NHWC
    return out2d.reshape(B, H, W, Cout)


# -------------------------------- pure-JAX reference -----------------------------------------
def _bn_ref(y, g, b):
    m = jnp.mean(y, axis=(0, 1, 2))
    v = jnp.mean((y - m) ** 2, axis=(0, 1, 2))
    return (y - m) * jax.lax.rsqrt(v + BN_EPS) * g + b


def resblock_ref(x, w1, g1, b1, w2, g2, b2, ws, gs, bs):
    dn = ('NHWC', 'HWIO', 'NHWC')
    c1 = jax.lax.conv_general_dilated(x, w1, (1, 1), ((1, 1), (1, 1)),
                                      dimension_numbers=dn, precision='highest')
    y1 = jnp.maximum(_bn_ref(c1, g1, b1), 0.0)
    c2 = jax.lax.conv_general_dilated(y1, w2, (1, 1), ((1, 1), (1, 1)),
                                      dimension_numbers=dn, precision='highest')
    left = _bn_ref(c2, g2, b2)
    cs = jax.lax.conv_general_dilated(x, ws, (1, 1), ((0, 0), (0, 0)),
                                      dimension_numbers=dn, precision='highest')
    short = _bn_ref(cs, gs, bs)
    return jnp.maximum(left + short, 0.0)


# --------------------------------------- main -------------------------------------------------
if __name__ == "__main__":
    key = jax.random.PRNGKey(0)
    B, H, W = 2, 16, 16
    Cin, Cout = 4, 8          # in_channel != out_channel -> shortcut conv1x1+BN is active
    ks = jax.random.split(key, 10)

    x = jax.random.normal(ks[0], (B, H, W, Cin), jnp.float32)
    w1 = 0.2 * jax.random.normal(ks[1], (3, 3, Cin, Cout), jnp.float32)    # conv1 HWIO
    w2 = 0.2 * jax.random.normal(ks[2], (3, 3, Cout, Cout), jnp.float32)   # conv2 HWIO
    ws = 0.2 * jax.random.normal(ks[3], (1, 1, Cin, Cout), jnp.float32)    # shortcut 1x1 HWIO
    g1 = 1.0 + 0.1 * jax.random.normal(ks[4], (Cout,), jnp.float32)
    b1 = 0.1 * jax.random.normal(ks[5], (Cout,), jnp.float32)
    g2 = 1.0 + 0.1 * jax.random.normal(ks[6], (Cout,), jnp.float32)
    b2 = 0.1 * jax.random.normal(ks[7], (Cout,), jnp.float32)
    gs = 1.0 + 0.1 * jax.random.normal(ks[8], (Cout,), jnp.float32)
    bs = 0.1 * jax.random.normal(ks[9], (Cout,), jnp.float32)

    out = resblock_forward(x, w1, g1, b1, w2, g2, b2, ws, gs, bs)
    out = jax.block_until_ready(out)

    ref = resblock_ref(x, w1, g1, b1, w2, g2, b2, ws, gs, bs)
    assert out.shape == (B, H, W, Cout)
    assert jnp.allclose(out, ref, rtol=2e-3, atol=2e-3), \
        f"max abs err {jnp.max(jnp.abs(out - ref))}"

    print("KERNEL_OK")
</pallas_src>

<mosaic_0001>
module attributes {stable_mosaic.version = 11 : i64} {
  func.func @_resblock_kernel(%arg0: memref<32x216xf32, #tpu.memory_space<vmem>>, %arg1: memref<32x64xf32, #tpu.memory_space<vmem>>, %arg2: memref<216x128xf32, #tpu.memory_space<vmem>>, %arg3: memref<3x128x128xf32, #tpu.memory_space<vmem>>, %arg4: memref<64x128xf32, #tpu.memory_space<vmem>>, %arg5: memref<128x8xf32, #tpu.memory_space<vmem>>, %arg6: memref<8x128xf32, #tpu.memory_space<vmem>>, %arg7: memref<32x1xf32, #tpu.memory_space<vmem>>, %arg8: memref<32x1xf32, #tpu.memory_space<vmem>>, %arg9: memref<1x8xf32, #tpu.memory_space<vmem>>, %arg10: memref<1x8xf32, #tpu.memory_space<vmem>>, %arg11: memref<1x8xf32, #tpu.memory_space<vmem>>, %arg12: memref<1x8xf32, #tpu.memory_space<vmem>>, %arg13: memref<1x8xf32, #tpu.memory_space<vmem>>, %arg14: memref<1x8xf32, #tpu.memory_space<vmem>>, %arg15: memref<32x128xf32, #tpu.memory_space<vmem>>) attributes {dimension_semantics = [], scalar_prefetch = 0 : i64, scratch_operands = 0 : i64, tpu.core_type = #tpu.core_type<tc>} {
    %c0 = arith.constant 0 : index
    %c0_0 = arith.constant 0 : index
    %0 = vector.load %arg5[%c0, %c0_0] : memref<128x8xf32, #tpu.memory_space<vmem>>, vector<128x8xf32>
    %c0_1 = arith.constant 0 : index
    %c0_2 = arith.constant 0 : index
    %1 = vector.load %arg6[%c0_1, %c0_2] : memref<8x128xf32, #tpu.memory_space<vmem>>, vector<8x128xf32>
    %c0_3 = arith.constant 0 : index
    %c0_4 = arith.constant 0 : index
    %2 = vector.load %arg0[%c0_3, %c0_4] : memref<32x216xf32, #tpu.memory_space<vmem>>, vector<32x216xf32>
    %c0_5 = arith.constant 0 : index
    %c0_6 = arith.constant 0 : index
    %3 = vector.load %arg2[%c0_5, %c0_6] : memref<216x128xf32, #tpu.memory_space<vmem>>, vector<216x128xf32>
    %cst = arith.constant dense<0.000000e+00> : vector<32x128xf32>
    %4 = tpu.matmul %2, %3, %cst {dimension_numbers = #tpu.dot_dimension_numbers<[1], [0], [0], [1], [0, 0, 1, 1], [], []>} : vector<32x216xf32>, vector<216x128xf32>, vector<32x128xf32> -> vector<32x128xf32>
    %c0_7 = arith.constant 0 : index
    %c0_8 = arith.constant 0 : index
    %5 = vector.load %arg9[%c0_7, %c0_8] : memref<1x8xf32, #tpu.memory_space<vmem>>, vector<1x8xf32>
    %c0_9 = arith.constant 0 : index
    %c0_10 = arith.constant 0 : index
    %6 = vector.load %arg10[%c0_9, %c0_10] : memref<1x8xf32, #tpu.memory_space<vmem>>, vector<1x8xf32>
    %cst_11 = arith.constant dense<0.000000e+00> : vector<32x8xf32>
    %7 = tpu.matmul %4, %0, %cst_11 {dimension_numbers = #tpu.dot_dimension_numbers<[1], [0], [0], [1], [0, 0, 1, 1], [], []>} : vector<32x128xf32>, vector<128x8xf32>, vector<32x8xf32> -> vector<32x8xf32>
    %8 = arith.mulf %4, %4 : vector<32x128xf32>
    %cst_12 = arith.constant dense<0.000000e+00> : vector<32x8xf32>
    %9 = tpu.matmul %8, %0, %cst_12 {dimension_numbers = #tpu.dot_dimension_numbers<[1], [0], [0], [1], [0, 0, 1, 1], [], []>} : vector<32x128xf32>, vector<128x8xf32>, vector<32x8xf32> -> vector<32x8xf32>
    %cst_13 = arith.constant dense<0.000000e+00> : vector<8xf32>
    %10 = vector.multi_reduction <add>, %7, %cst_13 [0] : vector<32x8xf32> to vector<8xf32>
    %11 = vector.shape_cast %10 : vector<8xf32> to vector<1x8xf32>
    %cst_14 = arith.constant 0.001953125 : f32
    %12 = vector.broadcast %cst_14 : f32 to vector<1x8xf32>
    %13 = arith.mulf %11, %12 : vector<1x8xf32>
    %cst_15 = arith.constant dense<0.000000e+00> : vector<8xf32>
    %14 = vector.multi_reduction <add>, %9, %cst_15 [0] : vector<32x8xf32> to vector<8xf32>
    %15 = vector.shape_cast %14 : vector<8xf32> to vector<1x8xf32>
    %cst_16 = arith.constant 0.001953125 : f32
    %16 = vector.broadcast %cst_16 : f32 to vector<1x8xf32>
    %17 = arith.mulf %15, %16 : vector<1x8xf32>
    %18 = arith.mulf %13, %13 : vector<1x8xf32>
    %19 = arith.subf %17, %18 : vector<1x8xf32>
    %cst_17 = arith.constant 9.99999974E-6 : f32
    %20 = vector.broadcast %cst_17 : f32 to vector<1x8xf32>
    %21 = arith.addf %19, %20 : vector<1x8xf32>
    %22 = math.rsqrt %21 : vector<1x8xf32>
    %23 = arith.mulf %22, %5 : vector<1x8xf32>
    %24 = arith.mulf %13, %23 : vector<1x8xf32>
    %25 = arith.subf %6, %24 : vector<1x8xf32>
    %cst_18 = arith.constant dense<0.000000e+00> : vector<1x128xf32>
    %26 = tpu.matmul %23, %1, %cst_18 {dimension_numbers = #tpu.dot_dimension_numbers<[1], [0], [0], [1], [0, 0, 1, 1], [], []>} : vector<1x8xf32>, vector<8x128xf32>, vector<1x128xf32> -> vector<1x128xf32>
    %cst_19 = arith.constant dense<0.000000e+00> : vector<1x128xf32>
    %27 = tpu.matmul %25, %1, %cst_19 {dimension_numbers = #tpu.dot_dimension_numbers<[1], [0], [0], [1], [0, 0, 1, 1], [], []>} : vector<1x8xf32>, vector<8x128xf32>, vector<1x128xf32> -> vector<1x128xf32>
    %28 = vector.broadcast %26 : vector<1x128xf32> to vector<32x128xf32>
    %29 = arith.mulf %4, %28 : vector<32x128xf32>
    %30 = vector.broadcast %27 : vector<1x128xf32> to vector<32x128xf32>
    %31 = arith.addf %29, %30 : vector<32x128xf32>
    %cst_20 = arith.constant 0.000000e+00 : f32
    %32 = vector.broadcast %cst_20 : f32 to vector<32x128xf32>
    %33 = arith.maximumf %31, %32 : vector<32x128xf32>
    %c1_i32 = arith.constant 1 : i32
    %34 = tpu.dynamic_rotate %33 by %c1_i32 dim 0 : vector<32x128xf32>, i32 -> vector<32x128xf32>
    %c0_21 = arith.constant 0 : index
    %c0_22 = arith.constant 0 : index
    %35 = vector.load %arg7[%c0_21, %c0_22] : memref<32x1xf32, #tpu.memory_space<vmem>>, vector<32x1xf32>
    %36 = vector.broadcast %35 : vector<32x1xf32> to vector<32x128xf32>
    %37 = arith.mulf %34, %36 : vector<32x128xf32>
    %c31_i32 = arith.constant 31 : i32
    %38 = tpu.dynamic_rotate %33 by %c31_i32 dim 0 : vector<32x128xf32>, i32 -> vector<32x128xf32>
    %c0_23 = arith.constant 0 : index
    %c0_24 = arith.constant 0 : index
    %39 = vector.load %arg8[%c0_23, %c0_24] : memref<32x1xf32, #tpu.memory_space<vmem>>, vector<32x1xf32>
    %40 = vector.broadcast %39 : vector<32x1xf32> to vector<32x128xf32>
    %41 = arith.mulf %38, %40 : vector<32x128xf32>
    %c0_25 = arith.constant 0 : index
    %c0_26 = arith.constant 0 : index
    %c0_27 = arith.constant 0 : index
    %42 = vector.load %arg3[%c0_25, %c0_26, %c0_27] : memref<3x128x128xf32, #tpu.memory_space<vmem>>, vector<1x128x128xf32>
    %43 = vector.shape_cast %42 : vector<1x128x128xf32> to vector<128x128xf32>
    %cst_28 = arith.constant dense<0.000000e+00> : vector<32x128xf32>
    %44 = tpu.matmul %37, %43, %cst_28 {dimension_numbers = #tpu.dot_dimension_numbers<[1], [0], [0], [1], [0, 0, 1, 1], [], []>} : vector<32x128xf32>, vector<128x128xf32>, vector<32x128xf32> -> vector<32x128xf32>
    %c1 = arith.constant 1 : index
    %c0_29 = arith.constant 0 : index
    %c0_30 = arith.constant 0 : index
    %45 = vector.load %arg3[%c1, %c0_29, %c0_30] : memref<3x128x128xf32, #tpu.memory_space<vmem>>, vector<1x128x128xf32>
    %46 = vector.shape_cast %45 : vector<1x128x128xf32> to vector<128x128xf32>
    %cst_31 = arith.constant dense<0.000000e+00> : vector<32x128xf32>
    %47 = tpu.matmul %33, %46, %cst_31 {dimension_numbers = #tpu.dot_dimension_numbers<[1], [0], [0], [1], [0, 0, 1, 1], [], []>} : vector<32x128xf32>, vector<128x128xf32>, vector<32x128xf32> -> vector<32x128xf32>
    %48 = arith.addf %44, %47 : vector<32x128xf32>
    %c2 = arith.constant 2 : index
    %c0_32 = arith.constant 0 : index
    %c0_33 = arith.constant 0 : index
    %49 = vector.load %arg3[%c2, %c0_32, %c0_33] : memref<3x128x128xf32, #tpu.memory_space<vmem>>, vector<1x128x128xf32>
    %50 = vector.shape_cast %49 : vector<1x128x128xf32> to vector<128x128xf32>
    %cst_34 = arith.constant dense<0.000000e+00> : vector<32x128xf32>
    %51 = tpu.matmul %41, %50, %cst_34 {dimension_numbers = #tpu.dot_dimension_numbers<[1], [0], [0], [1], [0, 0, 1, 1], [], []>} : vector<32x128xf32>, vector<128x128xf32>, vector<32x128xf32> -> vector<32x128xf32>
    %52 = arith.addf %48, %51 : vector<32x128xf32>
    %c0_35 = arith.constant 0 : index
    %c0_36 = arith.constant 0 : index
    %53 = vector.load %arg11[%c0_35, %c0_36] : memref<1x8xf32, #tpu.memory_space<vmem>>, vector<1x8xf32>
    %c0_37 = arith.constant 0 : index
    %c0_38 = arith.constant 0 : index
    %54 = vector.load %arg12[%c0_37, %c0_38] : memref<1x8xf32, #tpu.memory_space<vmem>>, vector<1x8xf32>
    %cst_39 = arith.constant dense<0.000000e+00> : vector<32x8xf32>
    %55 = tpu.matmul %52, %0, %cst_39 {dimension_numbers = #tpu.dot_dimension_numbers<[1], [0], [0], [1], [0, 0, 1, 1], [], []>} : vector<32x128xf32>, vector<128x8xf32>, vector<32x8xf32> -> vector<32x8xf32>
    %56 = arith.mulf %52, %52 : vector<32x128xf32>
    %cst_40 = arith.constant dense<0.000000e+00> : vector<32x8xf32>
    %57 = tpu.matmul %56, %0, %cst_40 {dimension_numbers = #tpu.dot_dimension_numbers<[1], [0], [0], [1], [0, 0, 1, 1], [], []>} : vector<32x128xf32>, vector<128x8xf32>, vector<32x8xf32> -> vector<32x8xf32>
    %cst_41 = arith.constant dense<0.000000e+00> : vector<8xf32>
    %58 = vector.multi_reduction <add>, %55, %cst_41 [0] : vector<32x8xf32> to vector<8xf32>
    %59 = vector.shape_cast %58 : vector<8xf32> to vector<1x8xf32>
    %cst_42 = arith.constant 0.001953125 : f32
    %60 = vector.broadcast %cst_42 : f32 to vector<1x8xf32>
    %61 = arith.mulf %59, %60 : vector<1x8xf32>
    %cst_43 = arith.constant dense<0.000000e+00> : vector<8xf32>
    %62 = vector.multi_reduction <add>, %57, %cst_43 [0] : vector<32x8xf32> to vector<8xf32>
    %63 = vector.shape_cast %62 : vector<8xf32> to vector<1x8xf32>
    %cst_44 = arith.constant 0.001953125 : f32
    %64 = vector.broadcast %cst_44 : f32 to vector<1x8xf32>
    %65 = arith.mulf %63, %64 : vector<1x8xf32>
    %66 = arith.mulf %61, %61 : vector<1x8xf32>
    %67 = arith.subf %65, %66 : vector<1x8xf32>
    %cst_45 = arith.constant 9.99999974E-6 : f32
    %68 = vector.broadcast %cst_45 : f32 to vector<1x8xf32>
    %69 = arith.addf %67, %68 : vector<1x8xf32>
    %70 = math.rsqrt %69 : vector<1x8xf32>
    %71 = arith.mulf %70, %53 : vector<1x8xf32>
    %72 = arith.mulf %61, %71 : vector<1x8xf32>
    %73 = arith.subf %54, %72 : vector<1x8xf32>
    %cst_46 = arith.constant dense<0.000000e+00> : vector<1x128xf32>
    %74 = tpu.matmul %71, %1, %cst_46 {dimension_numbers = #tpu.dot_dimension_numbers<[1], [0], [0], [1], [0, 0, 1, 1], [], []>} : vector<1x8xf32>, vector<8x128xf32>, vector<1x128xf32> -> vector<1x128xf32>
    %cst_47 = arith.constant dense<0.000000e+00> : vector<1x128xf32>
    %75 = tpu.matmul %73, %1, %cst_47 {dimension_numbers = #tpu.dot_dimension_numbers<[1], [0], [0], [1], [0, 0, 1, 1], [], []>} : vector<1x8xf32>, vector<8x128xf32>, vector<1x128xf32> -> vector<1x128xf32>
    %76 = vector.broadcast %74 : vector<1x128xf32> to vector<32x128xf32>
    %77 = arith.mulf %52, %76 : vector<32x128xf32>
    %78 = vector.broadcast %75 : vector<1x128xf32> to vector<32x128xf32>
    %79 = arith.addf %77, %78 : vector<32x128xf32>
    %c0_48 = arith.constant 0 : index
    %c0_49 = arith.constant 0 : index
    %80 = vector.load %arg1[%c0_48, %c0_49] : memref<32x64xf32, #tpu.memory_space<vmem>>, vector<32x64xf32>
    %c0_50 = arith.constant 0 : index
    %c0_51 = arith.constant 0 : index
    %81 = vector.load %arg4[%c0_50, %c0_51] : memref<64x128xf32, #tpu.memory_space<vmem>>, vector<64x128xf32>
    %cst_52 = arith.constant dense<0.000000e+00> : vector<32x128xf32>
    %82 = tpu.matmul %80, %81, %cst_52 {dimension_numbers = #tpu.dot_dimension_numbers<[1], [0], [0], [1], [0, 0, 1, 1], [], []>} : vector<32x64xf32>, vector<64x128xf32>, vector<32x128xf32> -> vector<32x128xf32>
    %c0_53 = arith.constant 0 : index
    %c0_54 = arith.constant 0 : index
    %83 = vector.load %arg13[%c0_53, %c0_54] : memref<1x8xf32, #tpu.memory_space<vmem>>, vector<1x8xf32>
    %c0_55 = arith.constant 0 : index
    %c0_56 = arith.constant 0 : index
    %84 = vector.load %arg14[%c0_55, %c0_56] : memref<1x8xf32, #tpu.memory_space<vmem>>, vector<1x8xf32>
    %cst_57 = arith.constant dense<0.000000e+00> : vector<32x8xf32>
    %85 = tpu.matmul %82, %0, %cst_57 {dimension_numbers = #tpu.dot_dimension_numbers<[1], [0], [0], [1], [0, 0, 1, 1], [], []>} : vector<32x128xf32>, vector<128x8xf32>, vector<32x8xf32> -> vector<32x8xf32>
    %86 = arith.mulf %82, %82 : vector<32x128xf32>
    %cst_58 = arith.constant dense<0.000000e+00> : vector<32x8xf32>
    %87 = tpu.matmul %86, %0, %cst_58 {dimension_numbers = #tpu.dot_dimension_numbers<[1], [0], [0], [1], [0, 0, 1, 1], [], []>} : vector<32x128xf32>, vector<128x8xf32>, vector<32x8xf32> -> vector<32x8xf32>
    %cst_59 = arith.constant dense<0.000000e+00> : vector<8xf32>
    %88 = vector.multi_reduction <add>, %85, %cst_59 [0] : vector<32x8xf32> to vector<8xf32>
    %89 = vector.shape_cast %88 : vector<8xf32> to vector<1x8xf32>
    %cst_60 = arith.constant 0.001953125 : f32
    %90 = vector.broadcast %cst_60 : f32 to vector<1x8xf32>
    %91 = arith.mulf %89, %90 : vector<1x8xf32>
    %cst_61 = arith.constant dense<0.000000e+00> : vector<8xf32>
    %92 = vector.multi_reduction <add>, %87, %cst_61 [0] : vector<32x8xf32> to vector<8xf32>
    %93 = vector.shape_cast %92 : vector<8xf32> to vector<1x8xf32>
    %cst_62 = arith.constant 0.001953125 : f32
    %94 = vector.broadcast %cst_62 : f32 to vector<1x8xf32>
    %95 = arith.mulf %93, %94 : vector<1x8xf32>
    %96 = arith.mulf %91, %91 : vector<1x8xf32>
    %97 = arith.subf %95, %96 : vector<1x8xf32>
    %cst_63 = arith.constant 9.99999974E-6 : f32
    %98 = vector.broadcast %cst_63 : f32 to vector<1x8xf32>
    %99 = arith.addf %97, %98 : vector<1x8xf32>
    %100 = math.rsqrt %99 : vector<1x8xf32>
    %101 = arith.mulf %100, %83 : vector<1x8xf32>
    %102 = arith.mulf %91, %101 : vector<1x8xf32>
    %103 = arith.subf %84, %102 : vector<1x8xf32>
    %cst_64 = arith.constant dense<0.000000e+00> : vector<1x128xf32>
    %104 = tpu.matmul %101, %1, %cst_64 {dimension_numbers = #tpu.dot_dimension_numbers<[1], [0], [0], [1], [0, 0, 1, 1], [], []>} : vector<1x8xf32>, vector<8x128xf32>, vector<1x128xf32> -> vector<1x128xf32>
    %cst_65 = arith.constant dense<0.000000e+00> : vector<1x128xf32>
    %105 = tpu.matmul %103, %1, %cst_65 {dimension_numbers = #tpu.dot_dimension_numbers<[1], [0], [0], [1], [0, 0, 1, 1], [], []>} : vector<1x8xf32>, vector<8x128xf32>, vector<1x128xf32> -> vector<1x128xf32>
    %106 = vector.broadcast %104 : vector<1x128xf32> to vector<32x128xf32>
    %107 = arith.mulf %82, %106 : vector<32x128xf32>
    %108 = vector.broadcast %105 : vector<1x128xf32> to vector<32x128xf32>
    %109 = arith.addf %107, %108 : vector<32x128xf32>
    %110 = arith.addf %79, %109 : vector<32x128xf32>
    %cst_66 = arith.constant 0.000000e+00 : f32
    %111 = vector.broadcast %cst_66 : f32 to vector<32x128xf32>
    %112 = arith.maximumf %110, %111 : vector<32x128xf32>
    %c0_67 = arith.constant 0 : index
    %c0_68 = arith.constant 0 : index
    %113 = vector.load %arg15[%c0_67, %c0_68] : memref<32x128xf32, #tpu.memory_space<vmem>>, vector<32x128xf32>
    tpu.vector_store %arg15[%c0_67, %c0_68], %112 {strides = array<i32>} : memref<32x128xf32, #tpu.memory_space<vmem>>, vector<32x128xf32>,
    return
  }
}

</mosaic_0001>

<llo_original>
// kernel: tpu_custom_call.1
$region0: #{tpu_custom_call.1}
  #allocation0 [shape = 'u32[]', space=smem, size = 0x4, offset = 0x4, fixed_abs, tag = 'smem constant byte address 0x4 - core index']
  #allocation1 [shape = 'u32[144,128]{1,0:T(1,128)}', space=vmem, size = 0x12000, scoped, tag = 'internal scratch']
  %s0 = inlined_call_operand.vmem [shape: f32[32,216], index: 0, kind: input, shape index: {}]
  %s1 = inlined_call_operand.vmem [shape: f32[32,64], index: 1, kind: input, shape index: {}]
  %s2 = inlined_call_operand.hbm [shape: f32[216,128], index: 2, kind: input, shape index: {}]
  %s3 = inlined_call_operand.hbm [shape: f32[3,128,128], index: 3, kind: input, shape index: {}]
  %s4 = inlined_call_operand.vmem [shape: f32[64,128], index: 4, kind: input, shape index: {}]
  %s5 = inlined_call_operand.vmem [shape: f32[128,8], index: 5, kind: input, shape index: {}]
  %s6 = inlined_call_operand.vmem [shape: f32[8,128], index: 6, kind: input, shape index: {}]
  %s7 = inlined_call_operand.vmem [shape: f32[32,1], index: 7, kind: input, shape index: {}]
  %s8 = inlined_call_operand.vmem [shape: f32[32,1], index: 8, kind: input, shape index: {}]
  %s9 = inlined_call_operand.vmem [shape: f32[1,8], index: 9, kind: input, shape index: {}]
  %s10 = inlined_call_operand.vmem [shape: f32[1,8], index: 10, kind: input, shape index: {}]
  %s11 = inlined_call_operand.vmem [shape: f32[1,8], index: 11, kind: input, shape index: {}]
  %s12 = inlined_call_operand.vmem [shape: f32[1,8], index: 12, kind: input, shape index: {}]
  %s13 = inlined_call_operand.vmem [shape: f32[1,8], index: 13, kind: input, shape index: {}]
  %s14 = inlined_call_operand.vmem [shape: f32[1,8], index: 14, kind: input, shape index: {}]
  %s15 = inlined_call_operand.hbm [shape: f32[32,128], index: 15, kind: output, shape index: {}]
  %s16 = sld [smem:[#allocation0]]
  $region78: #{tpu_custom_call.1} parent=0
    _
  %s18 = ssub.s32 1, %s16
  %s19 = scalar_select 0, %s18, %s16
  $region1: #{tpu_custom_call.1} parent=0
    #allocation2 [shape = 'u8[110592]{0}', space=vmem, size = 0x1b000, scoped, tag = 'input window, operand 2, single buffered']
    #allocation3 [shape = 's32[1]{0}', space=sflag, size = 0x4, scoped, tag = 'scoped memory for tpu_custom_call.1']
    #allocation4 [shape = 's32[1]{0}', space=sflag, size = 0x4, scoped, tag = 'scoped memory for tpu_custom_call.1']
    #allocation5 [shape = 'u8[196608]{0}', space=vmem, size = 0x30000, scoped, tag = 'input window, operand 3, single buffered']
    #allocation6 [shape = 's32[1]{0}', space=sflag, size = 0x4, scoped, tag = 'scoped memory for tpu_custom_call.1']
    #allocation7 [shape = 'u8[16384]{0}', space=vmem, size = 0x4000, scoped, tag = 'output window, operand 0, single buffered']
    %20 = vsyncpa [#allocation3], 0
    %21 = vsyncpa [#allocation6], 0
    %22 = vsyncpa [#allocation4], 0
    // Predicated region
    $region2: #{tpu_custom_call.1} parent=1 // pred_check
      _
    $region3: #{tpu_custom_call.1} parent=1 // pred_check_branch
      %24 = sbr.rel (0) target = $region5
    $region4: #{tpu_custom_call.1} parent=1 // pred_region
      _
    $region5: #{tpu_custom_call.1} parent=1 // pred_fallthru
      _
    // Predicated region
    $region6: #{tpu_custom_call.1} parent=1 // pred_check
      _
    $region7: #{tpu_custom_call.1} parent=1 // pred_check_branch
      %26 = sbr.rel (0) target = $region9
    $region8: #{tpu_custom_call.1} parent=1 // pred_region
      _
    $region9: #{tpu_custom_call.1} parent=1 // pred_fallthru
      _
    // Predicated region
    $region10: #{tpu_custom_call.1} parent=1 // pred_check
      _
    $region11: #{tpu_custom_call.1} parent=1 // pred_check_branch
      %28 = sbr.rel (0) target = $region13
    $region12: #{tpu_custom_call.1} parent=1 // pred_region
      %s30 = ssub.s32 3456, 3456
      %31 = vsyncadd [#allocation3], %s30
      %s32 = sshll.u32 [#allocation2], 4
      %s33 = int_to_ptr.vmem [resolvable:$true] %s32
      %38 = dma.hbm_to_vmem [thread:$0]  %s2, 3456, %s33, [#allocation3], 128, 128, 8
    $region13: #{tpu_custom_call.1} parent=1 // pred_fallthru
      _
    // Predicated region
    $region14: #{tpu_custom_call.1} parent=1 // pred_check
      _
    $region15: #{tpu_custom_call.1} parent=1 // pred_check_branch
      %40 = sbr.rel (0) target = $region17
    $region16: #{tpu_custom_call.1} parent=1 // pred_region
      %s42 = ssub.s32 6144, 6144
      %43 = vsyncadd [#allocation6], %s42
      %s44 = sshll.u32 [#allocation5], 4
      %s45 = int_to_ptr.vmem [resolvable:$true] %s44
      %50 = dma.hbm_to_vmem [thread:$0]  %s3, 6144, %s45, [#allocation6], 128, 128, 8
    $region17: #{tpu_custom_call.1} parent=1 // pred_fallthru
      _
    // Predicated region
    $region18: #{tpu_custom_call.1} parent=1 // pred_check
      _
    $region19: #{tpu_custom_call.1} parent=1 // pred_check_branch
      %52 = sbr.rel (0) target = $region21
    $region20: #{tpu_custom_call.1} parent=1 // pred_region
      _
    $region21: #{tpu_custom_call.1} parent=1 // pred_fallthru
      _
    // Predicated region
    $region22: #{tpu_custom_call.1} parent=1 // pred_check
      _
    $region23: #{tpu_custom_call.1} parent=1 // pred_check_branch
      %54 = sbr.rel (0) target = $region25
    $region24: #{tpu_custom_call.1} parent=1 // pred_region
      _
    $region25: #{tpu_custom_call.1} parent=1 // pred_fallthru
      _
    // Predicated region
    $region26: #{tpu_custom_call.1} parent=1 // pred_check
      _
    $region27: #{tpu_custom_call.1} parent=1 // pred_check_branch
      %56 = sbr.rel (0) target = $region29
    $region28: #{tpu_custom_call.1} parent=1 // pred_region
      _
    $region29: #{tpu_custom_call.1} parent=1 // pred_fallthru
      _
    // Predicated region
    $region30: #{tpu_custom_call.1} parent=1 // pred_check
      _
    $region31: #{tpu_custom_call.1} parent=1 // pred_check_branch
      %58 = sbr.rel (0) target = $region33
    $region32: #{tpu_custom_call.1} parent=1 // pred_region
      _
    $region33: #{tpu_custom_call.1} parent=1 // pred_fallthru
      _
    // Predicated region
    $region34: #{tpu_custom_call.1} parent=1 // pred_check
      _
    $region35: #{tpu_custom_call.1} parent=1 // pred_check_branch
      %60 = sbr.rel (0) target = $region37
    $region36: #{tpu_custom_call.1} parent=1 // pred_region
      _
    $region37: #{tpu_custom_call.1} parent=1 // pred_fallthru
      _
    // Predicated region
    $region38: #{tpu_custom_call.1} parent=1 // pred_check
      _
    $region39: #{tpu_custom_call.1} parent=1 // pred_check_branch
      %62 = sbr.rel (0) target = $region41
    $region40: #{tpu_custom_call.1} parent=1 // pred_region
      _
    $region41: #{tpu_custom_call.1} parent=1 // pred_fallthru
      _
    // Predicated region
    $region42: #{tpu_custom_call.1} parent=1 // pred_check
      _
    $region43: #{tpu_custom_call.1} parent=1 // pred_check_branch
      %64 = sbr.rel (0) target = $region45
    $region44: #{tpu_custom_call.1} parent=1 // pred_region
      _
    $region45: #{tpu_custom_call.1} parent=1 // pred_fallthru
      _
    // Predicated region
    $region46: #{tpu_custom_call.1} parent=1 // pred_check
      _
    $region47: #{tpu_custom_call.1} parent=1 // pred_check_branch
      %66 = sbr.rel (0) target = $region49
    $region48: #{tpu_custom_call.1} parent=1 // pred_region
      _
    $region49: #{tpu_custom_call.1} parent=1 // pred_fallthru
      _
    // Predicated region
    $region50: #{tpu_custom_call.1} parent=1 // pred_check
      _
    $region51: #{tpu_custom_call.1} parent=1 // pred_check_branch
      %68 = sbr.rel (0) target = $region53
    $region52: #{tpu_custom_call.1} parent=1 // pred_region
      _
    $region53: #{tpu_custom_call.1} parent=1 // pred_fallthru
      _
    // Predicated region
    $region54: #{tpu_custom_call.1} parent=1 // pred_check
      _
    $region55: #{tpu_custom_call.1} parent=1 // pred_check_branch
      %70 = sbr.rel (0) target = $region57
    $region56: #{tpu_custom_call.1} parent=1 // pred_region
      _
    $region57: #{tpu_custom_call.1} parent=1 // pred_fallthru
      _
    // Predicated region
    $region58: #{tpu_custom_call.1} parent=1 // pred_check
      _
    $region59: #{tpu_custom_call.1} parent=1 // pred_check_branch
      %72 = sbr.rel (0) target = $region61
    $region60: #{tpu_custom_call.1} parent=1 // pred_region
      _
    $region61: #{tpu_custom_call.1} parent=1 // pred_fallthru
      _
    // Predicated region
    $region62: #{tpu_custom_call.1} parent=1 // pred_check
      _
    $region63: #{tpu_custom_call.1} parent=1 // pred_check_branch
      %74 = sbr.rel (0) target = $region65
    $region64: #{tpu_custom_call.1} parent=1 // pred_region
      %75 = dma.done [#allocation3], 3456
    $region65: #{tpu_custom_call.1} parent=1 // pred_fallthru
      _
    // Predicated region
    $region66: #{tpu_custom_call.1} parent=1 // pred_check
      _
    $region67: #{tpu_custom_call.1} parent=1 // pred_check_branch
      %77 = sbr.rel (0) target = $region69
    $region68: #{tpu_custom_call.1} parent=1 // pred_region
      %78 = dma.done [#allocation6], 6144
    $region69: #{tpu_custom_call.1} parent=1 // pred_fallthru
      _
    %v79 = vld [vmem:[%s5] sm:$0xff]
    %v80 = vld [vmem:[%s5 + $0x8] sm:$0xff]
    %v81 = vld [vmem:[%s5 + $0x10] sm:$0xff]
    %v82 = vld [vmem:[%s5 + $0x18] sm:$0xff]
    %v83 = vld [vmem:[%s5 + $0x20] sm:$0xff]
    %v84 = vld [vmem:[%s5 + $0x28] sm:$0xff]
    %v85 = vld [vmem:[%s5 + $0x30] sm:$0xff]
    %v86 = vld [vmem:[%s5 + $0x38] sm:$0xff]
    %v87 = vld [vmem:[%s5 + $0x40] sm:$0xff]
    %v88 = vld [vmem:[%s5 + $0x48] sm:$0xff]
    %v89 = vld [vmem:[%s5 + $0x50] sm:$0xff]
    %v90 = vld [vmem:[%s5 + $0x58] sm:$0xff]
    %v91 = vld [vmem:[%s5 + $0x60] sm:$0xff]
    %v92 = vld [vmem:[%s5 + $0x68] sm:$0xff]
    %v93 = vld [vmem:[%s5 + $0x70] sm:$0xff]
    %v94 = vld [vmem:[%s5 + $0x78] sm:$0xff]
    %v95 = vld [vmem:[%s6] sm:$0xff]
    %v96 = vld [vmem:[%s0] sm:$0xff]
    %v97 = vld [vmem:[%s0 + $0x8] sm:$0xff]
    %v98 = vld [vmem:[%s0 + $0x10] sm:$0xff]
    %v99 = vld [vmem:[%s0 + $0x18] sm:$0xff]
    %v100 = vld [vmem:[%s0 + $0x20] sm:$0xff]
    %v101 = vld [vmem:[%s0 + $0x28] sm:$0xff]
    %v102 = vld [vmem:[%s0 + $0x30] sm:$0xff]
    %v103 = vld [vmem:[%s0 + $0x38] sm:$0xff]
    %v104 = vld [vmem:[#allocation2] sm:$0xff]
    %v105 = vld [vmem:[#allocation2 + $0x8] sm:$0xff]
    %v106 = vld [vmem:[#allocation2 + $0x10] sm:$0xff]
    %v107 = vld [vmem:[#allocation2 + $0x18] sm:$0xff]
    %v108 = vld [vmem:[#allocation2 + $0x20] sm:$0xff]
    %v109 = vld [vmem:[#allocation2 + $0x28] sm:$0xff]
    %v110 = vld [vmem:[#allocation2 + $0x30] sm:$0xff]
    %v111 = vld [vmem:[#allocation2 + $0x38] sm:$0xff]
    %v112 = vld [vmem:[#allocation2 + $0x40] sm:$0xff]
    %v113 = vld [vmem:[#allocation2 + $0x48] sm:$0xff]
    %v114 = vld [vmem:[#allocation2 + $0x50] sm:$0xff]
    %v115 = vld [vmem:[#allocation2 + $0x58] sm:$0xff]
    %v116 = vld [vmem:[#allocation2 + $0x60] sm:$0xff]
    %v117 = vld [vmem:[#allocation2 + $0x68] sm:$0xff]
    %v118 = vld [vmem:[#allocation2 + $0x70] sm:$0xff]
    %v119 = vld [vmem:[#allocation2 + $0x78] sm:$0xff]
    %v120 = vld [vmem:[#allocation2 + $0x80] sm:$0xff]
    %v121 = vld [vmem:[#allocation2 + $0x88] sm:$0xff]
    %v122 = vld [vmem:[#allocation2 + $0x90] sm:$0xff]
    %v123 = vld [vmem:[#allocation2 + $0x98] sm:$0xff]
    %v124 = vld [vmem:[#allocation2 + $0xa0] sm:$0xff]
    %v125 = vld [vmem:[#allocation2 + $0xa8] sm:$0xff]
    %v126 = vld [vmem:[#allocation2 + $0xb0] sm:$0xff]
    %v127 = vld [vmem:[#allocation2 + $0xb8] sm:$0xff]
    %v128 = vld [vmem:[#allocation2 + $0xc0] sm:$0xff]
    %v129 = vld [vmem:[#allocation2 + $0xc8] sm:$0xff]
    %v130 = vld [vmem:[#allocation2 + $0xd0] sm:$0xff]
    %vm131 = vcmask 719872
    %v133 = vsel %vm131, %v97, 0
    %v136 = vsel %vm131, %v99, 0
    %v139 = vsel %vm131, %v101, 0
    %v142 = vsel %vm131, %v103, 0
    %144 = vmatprep.subr.mxu0 0.0
    %145 = vmatpush1.msra.mxu0 %v119
    %146 = vmatprep.subr.mxu0 0.0
    %147 = vmatpush1.msra.mxu0 %v118
    %148 = vmatprep.subr.mxu0 0.0
    %149 = vmatpush1.msra.mxu0 %v117
    %150 = vmatprep.subr.mxu0 0.0
    %151 = vmatpush1.msra.mxu0 %v116
    %152 = vmatprep.subr.mxu0 0.0
    %153 = vmatpush1.msra.mxu0 %v115
    %154 = vmatprep.subr.mxu0 0.0
    %155 = vmatpush1.msra.mxu0 %v114
    %156 = vmatprep.subr.mxu0 0.0
    %157 = vmatpush1.msra.mxu0 %v113
    %158 = vmatprep.subr.mxu0 0.0
    %159 = vmatpush1.msra.mxu0 %v112
    %160 = vmatprep.subr.mxu0 0.0
    %161 = vmatpush1.msra.mxu0 %v111
    %162 = vmatprep.subr.mxu0 0.0
    %163 = vmatpush1.msra.mxu0 %v110
    %164 = vmatprep.subr.mxu0 0.0
    %165 = vmatpush1.msra.mxu0 %v109
    %166 = vmatprep.subr.mxu0 0.0
    %167 = vmatpush1.msra.mxu0 %v108
    %168 = vmatprep.subr.mxu0 0.0
    %169 = vmatpush1.msra.mxu0 %v107
    %170 = vmatprep.subr.mxu0 0.0
    %171 = vmatpush1.msra.mxu0 %v106
    %172 = vmatprep.subr.mxu0 0.0
    %173 = vmatpush1.msra.mxu0 %v105
    %174 = vmatprep.subr.mxu0 0.0
    %175 = vmatpush1.msra.mxu0 %v104
    %176 = vmatprep.subr.mxu0 0.0
    %177 = vmatpush2.msra.mxu0 0.0
    %178 = vmatprep.subr.mxu0 0.0
    %179 = vmatpush2.msra.mxu0 0.0
    %180 = vmatprep.subr.mxu0 0.0
    %181 = vmatpush2.msra.mxu0 0.0
    %182 = vmatprep.subr.mxu0 0.0
    %183 = vmatpush2.msra.mxu0 0.0
    %184 = vmatprep.subr.mxu0 0.0
    %185 = vmatpush2.msra.mxu0 0.0
    %186 = vmatprep.subr.mxu0 0.0
    %187 = vmatpush2.msra.mxu0 %v130
    %188 = vmatprep.subr.mxu0 0.0
    %189 = vmatpush2.msra.mxu0 %v129
    %190 = vmatprep.subr.mxu0 0.0
    %191 = vmatpush2.msra.mxu0 %v128
    %192 = vmatprep.subr.mxu0 0.0
    %193 = vmatpush2.msra.mxu0 %v127
    %194 = vmatprep.subr.mxu0 0.0
    %195 = vmatpush2.msra.mxu0 %v126
    %196 = vmatprep.subr.mxu0 0.0
    %197 = vmatpush2.msra.mxu0 %v125
    %198 = vmatprep.subr.mxu0 0.0
    %199 = vmatpush2.msra.mxu0 %v124
    %200 = vmatprep.subr.mxu0 0.0
    %201 = vmatpush2.msra.mxu0 %v123
    %202 = vmatprep.subr.mxu0 0.0
    %203 = vmatpush2.msra.mxu0 %v122
    %204 = vmatprep.subr.mxu0 0.0
    %205 = vmatpush2.msra.mxu0 %v121
    %206 = vmatprep.subr.mxu0 0.0
    %207 = vmatpush2.msra.mxu0 %v120
    %208 = vmatprep.mubr.f32.mxu0 %v133
    %209 = vmatmul.mubr.f32.gmra.mxu0 %v96
    %v210 = vpop.f32.mrf.mxu0
    %v211 = vadd.f32 0.0, %v210
    %v212 = vpop.f32.mrf.mxu0
    %213 = vmatprep.mubr.f32.mxu0 %v136
    %214 = vmatmul.mubr.f32.gmra.mxu0 %v98
    %v215 = vpop.f32.mrf.mxu0
    %v216 = vadd.f32 0.0, %v215
    %v217 = vpop.f32.mrf.mxu0
    %218 = vmatprep.mubr.f32.mxu0 %v139
    %219 = vmatmul.mubr.f32.gmra.mxu0 %v100
    %v220 = vpop.f32.mrf.mxu0
    %v221 = vadd.f32 0.0, %v220
    %v222 = vpop.f32.mrf.mxu0
    %223 = vmatprep.mubr.f32.mxu0 %v142
    %224 = vmatmul.mubr.f32.gmra.mxu0 %v102
    %v225 = vpop.f32.mrf.mxu0
    %v226 = vadd.f32 0.0, %v225
    %v227 = vpop.f32.mrf.mxu0
    %228 = vdwg.mxu0
    %v229 = vld [vmem:[%s9] sm:$0x1]
    %v230 = vld [vmem:[%s10] sm:$0x1]
    %231 = vmatprep.subr.mxu0 0.0
    %232 = vmatpush1.msra.mxu0 %v94
    %233 = vmatprep.subr.mxu0 0.0
    %234 = vmatpush1.msra.mxu0 %v93
    %235 = vmatprep.subr.mxu0 0.0
    %236 = vmatpush1.msra.mxu0 %v92
    %237 = vmatprep.subr.mxu0 0.0
    %238 = vmatpush1.msra.mxu0 %v91
    %239 = vmatprep.subr.mxu0 0.0
    %240 = vmatpush1.msra.mxu0 %v90
    %241 = vmatprep.subr.mxu0 0.0
    %242 = vmatpush1.msra.mxu0 %v89
    %243 = vmatprep.subr.mxu0 0.0
    %244 = vmatpush1.msra.mxu0 %v88
    %245 = vmatprep.subr.mxu0 0.0
    %246 = vmatpush1.msra.mxu0 %v87
    %247 = vmatprep.subr.mxu0 0.0
    %248 = vmatpush1.msra.mxu0 %v86
    %249 = vmatprep.subr.mxu0 0.0
    %250 = vmatpush1.msra.mxu0 %v85
    %251 = vmatprep.subr.mxu0 0.0
    %252 = vmatpush1.msra.mxu0 %v84
    %253 = vmatprep.subr.mxu0 0.0
    %254 = vmatpush1.msra.mxu0 %v83
    %255 = vmatprep.subr.mxu0 0.0
    %256 = vmatpush1.msra.mxu0 %v82
    %257 = vmatprep.subr.mxu0 0.0
    %258 = vmatpush1.msra.mxu0 %v81
    %259 = vmatprep.subr.mxu0 0.0
    %260 = vmatpush1.msra.mxu0 %v80
    %261 = vmatprep.subr.mxu0 0.0
    %262 = vmatpush1.msra.mxu0 %v79
    %263 = vmatprep.subr.mxu0 0.0
    %264 = vmatpush2.msra.mxu0 0.0
    %265 = vmatprep.subr.mxu0 0.0
    %266 = vmatpush2.msra.mxu0 0.0
    %267 = vmatprep.subr.mxu0 0.0
    %268 = vmatpush2.msra.mxu0 0.0
    %269 = vmatprep.subr.mxu0 0.0
    %270 = vmatpush2.msra.mxu0 0.0
    %271 = vmatprep.subr.mxu0 0.0
    %272 = vmatpush2.msra.mxu0 0.0
    %273 = vmatprep.subr.mxu0 0.0
    %274 = vmatpush2.msra.mxu0 0.0
    %275 = vmatprep.subr.mxu0 0.0
    %276 = vmatpush2.msra.mxu0 0.0
    %277 = vmatprep.subr.mxu0 0.0
    %278 = vmatpush2.msra.mxu0 0.0
    %279 = vmatprep.subr.mxu0 0.0
    %280 = vmatpush2.msra.mxu0 0.0
    %281 = vmatprep.subr.mxu0 0.0
    %282 = vmatpush2.msra.mxu0 0.0
    %283 = vmatprep.subr.mxu0 0.0
    %284 = vmatpush2.msra.mxu0 0.0
    %285 = vmatprep.subr.mxu0 0.0
    %286 = vmatpush2.msra.mxu0 0.0
    %287 = vmatprep.subr.mxu0 0.0
    %288 = vmatpush2.msra.mxu0 0.0
    %289 = vmatprep.subr.mxu0 0.0
    %290 = vmatpush2.msra.mxu0 0.0
    %291 = vmatprep.subr.mxu0 0.0
    %292 = vmatpush2.msra.mxu0 0.0
    %293 = vmatprep.subr.mxu0 0.0
    %294 = vmatpush2.msra.mxu0 0.0
    %295 = vmatprep.mubr.f32.mxu0 0.0
    %296 = vmatmul.mubr.f32.gmra.mxu0 %v211
    %v297 = vpop.f32.mrf.mxu0
    %v298 = vadd.f32 0.0, %v297
    %v299 = vpop.f32.mrf.mxu0
    %300 = vmatprep.mubr.f32.mxu0 0.0
    %301 = vmatmul.mubr.f32.gmra.mxu0 %v216
    %v302 = vpop.f32.mrf.mxu0
    %v303 = vadd.f32 0.0, %v302
    %v304 = vpop.f32.mrf.mxu0
    %305 = vmatprep.mubr.f32.mxu0 0.0
    %306 = vmatmul.mubr.f32.gmra.mxu0 %v221
    %v307 = vpop.f32.mrf.mxu0
    %v308 = vadd.f32 0.0, %v307
    %v309 = vpop.f32.mrf.mxu0
    %310 = vmatprep.mubr.f32.mxu0 0.0
    %311 = vmatmul.mubr.f32.gmra.mxu0 %v226
    %v312 = vpop.f32.mrf.mxu0
    %v313 = vadd.f32 0.0, %v312
    %v314 = vpop.f32.mrf.mxu0
    %315 = vdwg.mxu0
    %v316 = vmul.f32 %v211, %v211
    %v317 = vmul.f32 %v216, %v216
    %v318 = vmul.f32 %v221, %v221
    %v319 = vmul.f32 %v226, %v226
    %320 = vmatprep.subr.mxu0 0.0
    %321 = vmatpush1.msra.mxu0 %v94
    %322 = vmatprep.subr.mxu0 0.0
    %323 = vmatpush1.msra.mxu0 %v93
    %324 = vmatprep.subr.mxu0 0.0
    %325 = vmatpush1.msra.mxu0 %v92
    %326 = vmatprep.subr.mxu0 0.0
    %327 = vmatpush1.msra.mxu0 %v91
    %328 = vmatprep.subr.mxu0 0.0
    %329 = vmatpush1.msra.mxu0 %v90
    %330 = vmatprep.subr.mxu0 0.0
    %331 = vmatpush1.msra.mxu0 %v89
    %332 = vmatprep.subr.mxu0 0.0
    %333 = vmatpush1.msra.mxu0 %v88
    %334 = vmatprep.subr.mxu0 0.0
    %335 = vmatpush1.msra.mxu0 %v87
    %336 = vmatprep.subr.mxu0 0.0
    %337 = vmatpush1.msra.mxu0 %v86
    %338 = vmatprep.subr.mxu0 0.0
    %339 = vmatpush1.msra.mxu0 %v85
    %340 = vmatprep.subr.mxu0 0.0
    %341 = vmatpush1.msra.mxu0 %v84
    %342 = vmatprep.subr.mxu0 0.0
    %343 = vmatpush1.msra.mxu0 %v83
    %344 = vmatprep.subr.mxu0 0.0
    %345 = vmatpush1.msra.mxu0 %v82
    %346 = vmatprep.subr.mxu0 0.0
    %347 = vmatpush1.msra.mxu0 %v81
    %348 = vmatprep.subr.mxu0 0.0
    %349 = vmatpush1.msra.mxu0 %v80
    %350 = vmatprep.subr.mxu0 0.0
    %351 = vmatpush1.msra.mxu0 %v79
    %352 = vmatprep.subr.mxu0 0.0
    %353 = vmatpush2.msra.mxu0 0.0
    %354 = vmatprep.subr.mxu0 0.0
    %355 = vmatpush2.msra.mxu0 0.0
    %356 = vmatprep.subr.mxu0 0.0
    %357 = vmatpush2.msra.mxu0 0.0
    %358 = vmatprep.subr.mxu0 0.0
    %359 = vmatpush2.msra.mxu0 0.0
    %360 = vmatprep.subr.mxu0 0.0
    %361 = vmatpush2.msra.mxu0 0.0
    %362 = vmatprep.subr.mxu0 0.0
    %363 = vmatpush2.msra.mxu0 0.0
    %364 = vmatprep.subr.mxu0 0.0
    %365 = vmatpush2.msra.mxu0 0.0
    %366 = vmatprep.subr.mxu0 0.0
    %367 = vmatpush2.msra.mxu0 0.0
    %368 = vmatprep.subr.mxu0 0.0
    %369 = vmatpush2.msra.mxu0 0.0
    %370 = vmatprep.subr.mxu0 0.0
    %371 = vmatpush2.msra.mxu0 0.0
    %372 = vmatprep.subr.mxu0 0.0
    %373 = vmatpush2.msra.mxu0 0.0
    %374 = vmatprep.subr.mxu0 0.0
    %375 = vmatpush2.msra.mxu0 0.0
    %376 = vmatprep.subr.mxu0 0.0
    %377 = vmatpush2.msra.mxu0 0.0
    %378 = vmatprep.subr.mxu0 0.0
    %379 = vmatpush2.msra.mxu0 0.0
    %380 = vmatprep.subr.mxu0 0.0
    %381 = vmatpush2.msra.mxu0 0.0
    %382 = vmatprep.subr.mxu0 0.0
    %383 = vmatpush2.msra.mxu0 0.0
    %384 = vmatprep.mubr.f32.mxu0 0.0
    %385 = vmatmul.mubr.f32.gmra.mxu0 %v316
    %v386 = vpop.f32.mrf.mxu0
    %v387 = vadd.f32 0.0, %v386
    %v388 = vpop.f32.mrf.mxu0
    %389 = vmatprep.mubr.f32.mxu0 0.0
    %390 = vmatmul.mubr.f32.gmra.mxu0 %v317
    %v391 = vpop.f32.mrf.mxu0
    %v392 = vadd.f32 0.0, %v391
    %v393 = vpop.f32.mrf.mxu0
    %394 = vmatprep.mubr.f32.mxu0 0.0
    %395 = vmatmul.mubr.f32.gmra.mxu0 %v318
    %v396 = vpop.f32.mrf.mxu0
    %v397 = vadd.f32 0.0, %v396
    %v398 = vpop.f32.mrf.mxu0
    %399 = vmatprep.mubr.f32.mxu0 0.0
    %400 = vmatmul.mubr.f32.gmra.mxu0 %v319
    %v401 = vpop.f32.mrf.mxu0
    %v402 = vadd.f32 0.0, %v401
    %v403 = vpop.f32.mrf.mxu0
    %404 = vdwg.mxu0
    %vm405 = vcmask 64512
    %v406 = vsel %vm405, %v298, 0.0
    %v407 = vsel %vm405, %v303, 0.0
    %v408 = vadd.f32 %v406, %v407
    %v409 = vsel %vm405, %v308, 0.0
    %v410 = vadd.f32 %v408, %v409
    %v411 = vsel %vm405, %v313, 0.0
    %v412 = vadd.f32 %v410, %v411
    %v413 = vrot.slane %v412, 4
    %v414 = vadd.f32 %v412, %v413
    %v415 = vrot.slane %v414, 2
    %v416 = vadd.f32 %v414, %v415
    %v417 = vrot.slane %v416, 1
    %v418 = vadd.f32 %v416, %v417
    %v419 = vmul.f32 %v418, 0.001953125
    %v420 = vsel %vm405, %v387, 0.0
    %v421 = vsel %vm405, %v392, 0.0
    %v422 = vadd.f32 %v420, %v421
    %v423 = vsel %vm405, %v397, 0.0
    %v424 = vadd.f32 %v422, %v423
    %v425 = vsel %vm405, %v402, 0.0
    %v426 = vadd.f32 %v424, %v425
    %v427 = vrot.slane %v426, 4
    %v428 = vadd.f32 %v426, %v427
    %v429 = vrot.slane %v428, 2
    %v430 = vadd.f32 %v428, %v429
    %v431 = vrot.slane %v430, 1
    %v432 = vadd.f32 %v430, %v431
    %v433 = vmul.f32 %v432, 0.001953125
    %v434 = vmul.f32 %v419, %v419
    %v435 = vsub.f32 %v433, %v434
    %v436 = vadd.f32 %v435, 1e-05
    %v437 = vrsqrt.pop %v436
    %v438 = vmul.f32 %v437, %v229
    %v439 = vmul.f32 %v419, %v438
    %v440 = vsub.f32 %v230, %v439
    %v442 = vsel %vm405, %v438, 0
    %444 = vmatprep.subr.mxu0 0.0
    %445 = vmatpush1.msra.mxu0 0.0
    %446 = vmatprep.subr.mxu0 0.0
    %447 = vmatpush1.msra.mxu0 0.0
    %448 = vmatprep.subr.mxu0 0.0
    %449 = vmatpush1.msra.mxu0 0.0
    %450 = vmatprep.subr.mxu0 0.0
    %451 = vmatpush1.msra.mxu0 0.0
    %452 = vmatprep.subr.mxu0 0.0
    %453 = vmatpush1.msra.mxu0 0.0
    %454 = vmatprep.subr.mxu0 0.0
    %455 = vmatpush1.msra.mxu0 0.0
    %456 = vmatprep.subr.mxu0 0.0
    %457 = vmatpush1.msra.mxu0 0.0
    %458 = vmatprep.subr.mxu0 0.0
    %459 = vmatpush1.msra.mxu0 0.0
    %460 = vmatprep.subr.mxu0 0.0
    %461 = vmatpush1.msra.mxu0 0.0
    %462 = vmatprep.subr.mxu0 0.0
    %463 = vmatpush1.msra.mxu0 0.0
    %464 = vmatprep.subr.mxu0 0.0
    %465 = vmatpush1.msra.mxu0 0.0
    %466 = vmatprep.subr.mxu0 0.0
    %467 = vmatpush1.msra.mxu0 0.0
    %468 = vmatprep.subr.mxu0 0.0
    %469 = vmatpush1.msra.mxu0 0.0
    %470 = vmatprep.subr.mxu0 0.0
    %471 = vmatpush1.msra.mxu0 0.0
    %472 = vmatprep.subr.mxu0 0.0
    %473 = vmatpush1.msra.mxu0 0.0
    %474 = vmatprep.subr.mxu0 0.0
    %475 = vmatpush1.msra.mxu0 %v95
    %476 = vmatprep.subr.mxu0 0.0
    %477 = vmatpush2.msra.mxu0 0.0
    %478 = vmatprep.subr.mxu0 0.0
    %479 = vmatpush2.msra.mxu0 0.0
    %480 = vmatprep.subr.mxu0 0.0
    %481 = vmatpush2.msra.mxu0 0.0
    %482 = vmatprep.subr.mxu0 0.0
    %483 = vmatpush2.msra.mxu0 0.0
    %484 = vmatprep.subr.mxu0 0.0
    %485 = vmatpush2.msra.mxu0 0.0
    %486 = vmatprep.subr.mxu0 0.0
    %487 = vmatpush2.msra.mxu0 0.0
    %488 = vmatprep.subr.mxu0 0.0
    %489 = vmatpush2.msra.mxu0 0.0
    %490 = vmatprep.subr.mxu0 0.0
    %491 = vmatpush2.msra.mxu0 0.0
    %492 = vmatprep.subr.mxu0 0.0
    %493 = vmatpush2.msra.mxu0 0.0
    %494 = vmatprep.subr.mxu0 0.0
    %495 = vmatpush2.msra.mxu0 0.0
    %496 = vmatprep.subr.mxu0 0.0
    %497 = vmatpush2.msra.mxu0 0.0
    %498 = vmatprep.subr.mxu0 0.0
    %499 = vmatpush2.msra.mxu0 0.0
    %500 = vmatprep.subr.mxu0 0.0
    %501 = vmatpush2.msra.mxu0 0.0
    %502 = vmatprep.subr.mxu0 0.0
    %503 = vmatpush2.msra.mxu0 0.0
    %504 = vmatprep.subr.mxu0 0.0
    %505 = vmatpush2.msra.mxu0 0.0
    %506 = vmatprep.subr.mxu0 0.0
    %507 = vmatpush2.msra.mxu0 0.0
    %508 = vmatprep.mubr.f32.mxu0 0.0
    %509 = vmatmul.mubr.f32.gmra.mxu0 %v442
    %v510 = vpop.f32.mrf.mxu0
    %v511 = vadd.f32 0.0, %v510
    %v512 = vpop.f32.mrf.mxu0
    %513 = vdwg.mxu0
    %v515 = vsel %vm405, %v440, 0
    %517 = vmatprep.subr.mxu0 0.0
    %518 = vmatpush1.msra.mxu0 0.0
    %519 = vmatprep.subr.mxu0 0.0
    %520 = vmatpush1.msra.mxu0 0.0
    %521 = vmatprep.subr.mxu0 0.0
    %522 = vmatpush1.msra.mxu0 0.0
    %523 = vmatprep.subr.mxu0 0.0
    %524 = vmatpush1.msra.mxu0 0.0
    %525 = vmatprep.subr.mxu0 0.0
    %526 = vmatpush1.msra.mxu0 0.0
    %527 = vmatprep.subr.mxu0 0.0
    %528 = vmatpush1.msra.mxu0 0.0
    %529 = vmatprep.subr.mxu0 0.0
    %530 = vmatpush1.msra.mxu0 0.0
    %531 = vmatprep.subr.mxu0 0.0
    %532 = vmatpush1.msra.mxu0 0.0
    %533 = vmatprep.subr.mxu0 0.0
    %534 = vmatpush1.msra.mxu0 0.0
    %535 = vmatprep.subr.mxu0 0.0
    %536 = vmatpush1.msra.mxu0 0.0
    %537 = vmatprep.subr.mxu0 0.0
    %538 = vmatpush1.msra.mxu0 0.0
    %539 = vmatprep.subr.mxu0 0.0
    %540 = vmatpush1.msra.mxu0 0.0
    %541 = vmatprep.subr.mxu0 0.0
    %542 = vmatpush1.msra.mxu0 0.0
    %543 = vmatprep.subr.mxu0 0.0
    %544 = vmatpush1.msra.mxu0 0.0
    %545 = vmatprep.subr.mxu0 0.0
    %546 = vmatpush1.msra.mxu0 0.0
    %547 = vmatprep.subr.mxu0 0.0
    %548 = vmatpush1.msra.mxu0 %v95
    %549 = vmatprep.subr.mxu0 0.0
    %550 = vmatpush2.msra.mxu0 0.0
    %551 = vmatprep.subr.mxu0 0.0
    %552 = vmatpush2.msra.mxu0 0.0
    %553 = vmatprep.subr.mxu0 0.0
    %554 = vmatpush2.msra.mxu0 0.0
    %555 = vmatprep.subr.mxu0 0.0
    %556 = vmatpush2.msra.mxu0 0.0
    %557 = vmatprep.subr.mxu0 0.0
    %558 = vmatpush2.msra.mxu0 0.0
    %559 = vmatprep.subr.mxu0 0.0
    %560 = vmatpush2.msra.mxu0 0.0
    %561 = vmatprep.subr.mxu0 0.0
    %562 = vmatpush2.msra.mxu0 0.0
    %563 = vmatprep.subr.mxu0 0.0
    %564 = vmatpush2.msra.mxu0 0.0
    %565 = vmatprep.subr.mxu0 0.0
    %566 = vmatpush2.msra.mxu0 0.0
    %567 = vmatprep.subr.mxu0 0.0
    %568 = vmatpush2.msra.mxu0 0.0
    %569 = vmatprep.subr.mxu0 0.0
    %570 = vmatpush2.msra.mxu0 0.0
    %571 = vmatprep.subr.mxu0 0.0
    %572 = vmatpush2.msra.mxu0 0.0
    %573 = vmatprep.subr.mxu0 0.0
    %574 = vmatpush2.msra.mxu0 0.0
    %575 = vmatprep.subr.mxu0 0.0
    %576 = vmatpush2.msra.mxu0 0.0
    %577 = vmatprep.subr.mxu0 0.0
    %578 = vmatpush2.msra.mxu0 0.0
    %579 = vmatprep.subr.mxu0 0.0
    %580 = vmatpush2.msra.mxu0 0.0
    %581 = vmatprep.mubr.f32.mxu0 0.0
    %582 = vmatmul.mubr.f32.gmra.mxu0 %v515
    %v583 = vpop.f32.mrf.mxu0
    %v584 = vadd.f32 0.0, %v583
    %v585 = vpop.f32.mrf.mxu0
    %586 = vdwg.mxu0
    %v587 = vlaneseq
    %v588 = vshrl.u32 %v587, 7
    %v589 = vsub.s32 0, %v588
    %v590 = vrot.slane %v511, %v589
    %v591 = vmul.f32 %v211, %v590
    %v592 = vmul.f32 %v216, %v590
    %v593 = vmul.f32 %v221, %v590
    %v594 = vmul.f32 %v226, %v590
    %v595 = vlaneseq
    %v596 = vshrl.u32 %v595, 7
    %v597 = vsub.s32 0, %v596
    %v598 = vrot.slane %v584, %v597
    %v599 = vadd.f32 %v591, %v598
    %v600 = vadd.f32 %v592, %v598
    %v601 = vadd.f32 %v593, %v598
    %v602 = vadd.f32 %v594, %v598
    %v603 = vmax.f32 %v599, 0.0
    %v604 = vmax.f32 %v600, 0.0
    %v605 = vmax.f32 %v601, 0.0
    %v606 = vmax.f32 %v602, 0.0
    %v607 = vrot.slane %v603, 7
    %v608 = vrot.slane %v604, 7
    %v609 = vrot.slane %v605, 7
    %v610 = vrot.slane %v606, 7
    %v611 = vlaneseq
    %v612 = vshrl.u32 %v611, 7
    %vm613 = vcmp.lt.s32.totalorder %v612, 1
    %v614 = vsel %vm613, %v609, %v610
    %v615 = vsel %vm613, %v608, %v609
    %v616 = vsel %vm613, %v607, %v608
    %v617 = vsel %vm613, %v610, %v607
    %v618 = vld [vmem:[%s7] sm:$0xff]
    %v619 = vld [vmem:[%s7 + $0x8] sm:$0xff]
    %v620 = vld [vmem:[%s7 + $0x10] sm:$0xff]
    %v621 = vld [vmem:[%s7 + $0x18] sm:$0xff]
    %623 = vset.pattern.permute.xlu0 0
    %624 = vperm.xlu0 %623, %v618
    %v625 = vpop.permute.xlu0 %624
    %628 = vset.pattern.permute.xlu0 0
    %629 = vperm.xlu0 %628, %v619
    %v630 = vpop.permute.xlu0 %629
    %633 = vset.pattern.permute.xlu0 0
    %634 = vperm.xlu0 %633, %v620
    %v635 = vpop.permute.xlu0 %634
    %638 = vset.pattern.permute.xlu0 0
    %639 = vperm.xlu0 %638, %v621
    %v640 = vpop.permute.xlu0 %639
    %v642 = vmul.f32 %v617, %v625
    %v643 = vmul.f32 %v616, %v630
    %v644 = vmul.f32 %v615, %v635
    %v645 = vmul.f32 %v614, %v640
    %v646 = vrot.slane %v603, 1
    %v647 = vrot.slane %v604, 1
    %v648 = vrot.slane %v605, 1
    %v649 = vrot.slane %v606, 1
    %vm650 = vcmp.lt.s32.totalorder %v612, 7
    %v651 = vsel %vm650, %v648, %v649
    %v652 = vsel %vm650, %v647, %v648
    %v653 = vsel %vm650, %v646, %v647
    %v654 = vsel %vm650, %v649, %v646
    %v655 = vld [vmem:[%s8] sm:$0xff]
    %v656 = vld [vmem:[%s8 + $0x8] sm:$0xff]
    %v657 = vld [vmem:[%s8 + $0x10] sm:$0xff]
    %v658 = vld [vmem:[%s8 + $0x18] sm:$0xff]
    %660 = vset.pattern.permute.xlu0 0
    %661 = vperm.xlu0 %660, %v655
    %v662 = vpop.permute.xlu0 %661
    %665 = vset.pattern.permute.xlu0 0
    %666 = vperm.xlu0 %665, %v656
    %v667 = vpop.permute.xlu0 %666
    %670 = vset.pattern.permute.xlu0 0
    %671 = vperm.xlu0 %670, %v657
    %v672 = vpop.permute.xlu0 %671
    %675 = vset.pattern.permute.xlu0 0
    %676 = vperm.xlu0 %675, %v658
    %v677 = vpop.permute.xlu0 %676
    %v679 = vmul.f32 %v653, %v662
    %v680 = vmul.f32 %v652, %v667
    %v681 = vmul.f32 %v651, %v672
    %v682 = vmul.f32 %v654, %v677
    %v683 = vld [vmem:[#allocation5] sm:$0xff]
    %v684 = vld [vmem:[#allocation5 + $0x8] sm:$0xff]
    %v685 = vld [vmem:[#allocation5 + $0x10] sm:$0xff]
    %v686 = vld [vmem:[#allocation5 + $0x18] sm:$0xff]
    %v687 = vld [vmem:[#allocation5 + $0x20] sm:$0xff]
    %v688 = vld [vmem:[#allocation5 + $0x28] sm:$0xff]
    %v689 = vld [vmem:[#allocation5 + $0x30] sm:$0xff]
    %v690 = vld [vmem:[#allocation5 + $0x38] sm:$0xff]
    %v691 = vld [vmem:[#allocation5 + $0x40] sm:$0xff]
    %v692 = vld [vmem:[#allocation5 + $0x48] sm:$0xff]
    %v693 = vld [vmem:[#allocation5 + $0x50] sm:$0xff]
    %v694 = vld [vmem:[#allocation5 + $0x58] sm:$0xff]
    %v695 = vld [vmem:[#allocation5 + $0x60] sm:$0xff]
    %v696 = vld [vmem:[#allocation5 + $0x68] sm:$0xff]
    %v697 = vld [vmem:[#allocation5 + $0x70] sm:$0xff]
    %v698 = vld [vmem:[#allocation5 + $0x78] sm:$0xff]
    %s699 = scalar_lea.vmem [#allocation5], 128
    %v700 = vld [vmem:[%s699] sm:$0xff]
    %v701 = vld [vmem:[%s699 + $0x8] sm:$0xff]
    %v702 = vld [vmem:[%s699 + $0x10] sm:$0xff]
    %v703 = vld [vmem:[%s699 + $0x18] sm:$0xff]
    %v704 = vld [vmem:[%s699 + $0x20] sm:$0xff]
    %v705 = vld [vmem:[%s699 + $0x28] sm:$0xff]
    %v706 = vld [vmem:[%s699 + $0x30] sm:$0xff]
    %v707 = vld [vmem:[%s699 + $0x38] sm:$0xff]
    %v708 = vld [vmem:[%s699 + $0x40] sm:$0xff]
    %v709 = vld [vmem:[%s699 + $0x48] sm:$0xff]
    %v710 = vld [vmem:[%s699 + $0x50] sm:$0xff]
    %v711 = vld [vmem:[%s699 + $0x58] sm:$0xff]
    %v712 = vld [vmem:[%s699 + $0x60] sm:$0xff]
    %v713 = vld [vmem:[%s699 + $0x68] sm:$0xff]
    %v714 = vld [vmem:[%s699 + $0x70] sm:$0xff]
    %v715 = vld [vmem:[%s699 + $0x78] sm:$0xff]
    %716 = vmatprep.subr.mxu0 0.0
    %717 = vmatpush1.msra.mxu0 %v715
    %718 = vmatprep.subr.mxu0 0.0
    %719 = vmatpush1.msra.mxu0 %v714
    %720 = vmatprep.subr.mxu0 0.0
    %721 = vmatpush1.msra.mxu0 %v713
    %722 = vmatprep.subr.mxu0 0.0
    %723 = vmatpush1.msra.mxu0 %v712
    %724 = vmatprep.subr.mxu0 0.0
    %725 = vmatpush1.msra.mxu0 %v711
    %726 = vmatprep.subr.mxu0 0.0
    %727 = vmatpush1.msra.mxu0 %v710
    %728 = vmatprep.subr.mxu0 0.0
    %729 = vmatpush1.msra.mxu0 %v709
    %730 = vmatprep.subr.mxu0 0.0
    %731 = vmatpush1.msra.mxu0 %v708
    %732 = vmatprep.subr.mxu0 0.0
    %733 = vmatpush1.msra.mxu0 %v707
    %734 = vmatprep.subr.mxu0 0.0
    %735 = vmatpush1.msra.mxu0 %v706
    %736 = vmatprep.subr.mxu0 0.0
    %737 = vmatpush1.msra.mxu0 %v705
    %738 = vmatprep.subr.mxu0 0.0
    %739 = vmatpush1.msra.mxu0 %v704
    %740 = vmatprep.subr.mxu0 0.0
    %741 = vmatpush1.msra.mxu0 %v703
    %742 = vmatprep.subr.mxu0 0.0
    %743 = vmatpush1.msra.mxu0 %v702
    %744 = vmatprep.subr.mxu0 0.0
    %745 = vmatpush1.msra.mxu0 %v701
    %746 = vmatprep.subr.mxu0 0.0
    %747 = vmatpush1.msra.mxu0 %v700
    %748 = vmatprep.subr.mxu0 0.0
    %749 = vmatpush2.msra.mxu0 0.0
    %750 = vmatprep.subr.mxu0 0.0
    %751 = vmatpush2.msra.mxu0 0.0
    %752 = vmatprep.subr.mxu0 0.0
    %753 = vmatpush2.msra.mxu0 0.0
    %754 = vmatprep.subr.mxu0 0.0
    %755 = vmatpush2.msra.mxu0 0.0
    %756 = vmatprep.subr.mxu0 0.0
    %757 = vmatpush2.msra.mxu0 0.0
    %758 = vmatprep.subr.mxu0 0.0
    %759 = vmatpush2.msra.mxu0 0.0
    %760 = vmatprep.subr.mxu0 0.0
    %761 = vmatpush2.msra.mxu0 0.0
    %762 = vmatprep.subr.mxu0 0.0
    %763 = vmatpush2.msra.mxu0 0.0
    %764 = vmatprep.subr.mxu0 0.0
    %765 = vmatpush2.msra.mxu0 0.0
    %766 = vmatprep.subr.mxu0 0.0
    %767 = vmatpush2.msra.mxu0 0.0
    %768 = vmatprep.subr.mxu0 0.0
    %769 = vmatpush2.msra.mxu0 0.0
    %770 = vmatprep.subr.mxu0 0.0
    %771 = vmatpush2.msra.mxu0 0.0
    %772 = vmatprep.subr.mxu0 0.0
    %773 = vmatpush2.msra.mxu0 0.0
    %774 = vmatprep.subr.mxu0 0.0
    %775 = vmatpush2.msra.mxu0 0.0
    %776 = vmatprep.subr.mxu0 0.0
    %777 = vmatpush2.msra.mxu0 0.0
    %778 = vmatprep.subr.mxu0 0.0
    %779 = vmatpush2.msra.mxu0 0.0
    %780 = vmatprep.mubr.f32.mxu0 0.0
    %781 = vmatmul.mubr.f32.gmra.mxu0 %v603
    %v782 = vpop.f32.mrf.mxu0
    %v783 = vadd.f32 0.0, %v782
    %v784 = vpop.f32.mrf.mxu0
    %785 = vmatprep.mubr.f32.mxu0 0.0
    %786 = vmatmul.mubr.f32.gmra.mxu0 %v604
    %v787 = vpop.f32.mrf.mxu0
    %v788 = vadd.f32 0.0, %v787
    %v789 = vpop.f32.mrf.mxu0
    %790 = vmatprep.mubr.f32.mxu0 0.0
    %791 = vmatmul.mubr.f32.gmra.mxu0 %v605
    %v792 = vpop.f32.mrf.mxu0
    %v793 = vadd.f32 0.0, %v792
    %v794 = vpop.f32.mrf.mxu0
    %795 = vmatprep.mubr.f32.mxu0 0.0
    %796 = vmatmul.mubr.f32.gmra.mxu0 %v606
    %v797 = vpop.f32.mrf.mxu0
    %v798 = vadd.f32 0.0, %v797
    %v799 = vpop.f32.mrf.mxu0
    %800 = vdwg.mxu0
    %801 = vmatprep.subr.mxu0 0.0
    %802 = vmatpush1.msra.mxu0 %v698
    %803 = vmatprep.subr.mxu0 0.0
    %804 = vmatpush1.msra.mxu0 %v697
    %805 = vmatprep.subr.mxu0 0.0
    %806 = vmatpush1.msra.mxu0 %v696
    %807 = vmatprep.subr.mxu0 0.0
    %808 = vmatpush1.msra.mxu0 %v695
    %809 = vmatprep.subr.mxu0 0.0
    %810 = vmatpush1.msra.mxu0 %v694
    %811 = vmatprep.subr.mxu0 0.0
    %812 = vmatpush1.msra.mxu0 %v693
    %813 = vmatprep.subr.mxu0 0.0
    %814 = vmatpush1.msra.mxu0 %v692
    %815 = vmatprep.subr.mxu0 0.0
    %816 = vmatpush1.msra.mxu0 %v691
    %817 = vmatprep.subr.mxu0 0.0
    %818 = vmatpush1.msra.mxu0 %v690
    %819 = vmatprep.subr.mxu0 0.0
    %820 = vmatpush1.msra.mxu0 %v689
    %821 = vmatprep.subr.mxu0 0.0
    %822 = vmatpush1.msra.mxu0 %v688
    %823 = vmatprep.subr.mxu0 0.0
    %824 = vmatpush1.msra.mxu0 %v687
    %825 = vmatprep.subr.mxu0 0.0
    %826 = vmatpush1.msra.mxu0 %v686
    %827 = vmatprep.subr.mxu0 0.0
    %828 = vmatpush1.msra.mxu0 %v685
    %829 = vmatprep.subr.mxu0 0.0
    %830 = vmatpush1.msra.mxu0 %v684
    %831 = vmatprep.subr.mxu0 0.0
    %832 = vmatpush1.msra.mxu0 %v683
    %833 = vmatprep.subr.mxu0 0.0
    %834 = vmatpush2.msra.mxu0 0.0
    %835 = vmatprep.subr.mxu0 0.0
    %836 = vmatpush2.msra.mxu0 0.0
    %837 = vmatprep.subr.mxu0 0.0
    %838 = vmatpush2.msra.mxu0 0.0
    %839 = vmatprep.subr.mxu0 0.0
    %840 = vmatpush2.msra.mxu0 0.0
    %841 = vmatprep.subr.mxu0 0.0
    %842 = vmatpush2.msra.mxu0 0.0
    %843 = vmatprep.subr.mxu0 0.0
    %844 = vmatpush2.msra.mxu0 0.0
    %845 = vmatprep.subr.mxu0 0.0
    %846 = vmatpush2.msra.mxu0 0.0
    %847 = vmatprep.subr.mxu0 0.0
    %848 = vmatpush2.msra.mxu0 0.0
    %849 = vmatprep.subr.mxu0 0.0
    %850 = vmatpush2.msra.mxu0 0.0
    %851 = vmatprep.subr.mxu0 0.0
    %852 = vmatpush2.msra.mxu0 0.0
    %853 = vmatprep.subr.mxu0 0.0
    %854 = vmatpush2.msra.mxu0 0.0
    %855 = vmatprep.subr.mxu0 0.0
    %856 = vmatpush2.msra.mxu0 0.0
    %857 = vmatprep.subr.mxu0 0.0
    %858 = vmatpush2.msra.mxu0 0.0
    %859 = vmatprep.subr.mxu0 0.0
    %860 = vmatpush2.msra.mxu0 0.0
    %861 = vmatprep.subr.mxu0 0.0
    %862 = vmatpush2.msra.mxu0 0.0
    %863 = vmatprep.subr.mxu0 0.0
    %864 = vmatpush2.msra.mxu0 0.0
    %865 = vmatprep.mubr.f32.mxu0 0.0
    %866 = vmatmul.mubr.f32.gmra.mxu0 %v642
    %v867 = vpop.f32.mrf.mxu0
    %v868 = vadd.f32 %v783, %v867
    %v869 = vpop.f32.mrf.mxu0
    %870 = vmatprep.mubr.f32.mxu0 0.0
    %871 = vmatmul.mubr.f32.gmra.mxu0 %v643
    %v872 = vpop.f32.mrf.mxu0
    %v873 = vadd.f32 %v788, %v872
    %v874 = vpop.f32.mrf.mxu0
    %875 = vmatprep.mubr.f32.mxu0 0.0
    %876 = vmatmul.mubr.f32.gmra.mxu0 %v644
    %v877 = vpop.f32.mrf.mxu0
    %v878 = vadd.f32 %v793, %v877
    %v879 = vpop.f32.mrf.mxu0
    %880 = vmatprep.mubr.f32.mxu0 0.0
    %881 = vmatmul.mubr.f32.gmra.mxu0 %v645
    %v882 = vpop.f32.mrf.mxu0
    %v883 = vadd.f32 %v798, %v882
    %v884 = vpop.f32.mrf.mxu0
    %885 = vdwg.mxu0
    %s886 = scalar_lea.vmem [#allocation5], 256
    %v887 = vld [vmem:[%s886] sm:$0xff]
    %v888 = vld [vmem:[%s886 + $0x8] sm:$0xff]
    %v889 = vld [vmem:[%s886 + $0x10] sm:$0xff]
    %v890 = vld [vmem:[%s886 + $0x18] sm:$0xff]
    %v891 = vld [vmem:[%s886 + $0x20] sm:$0xff]
    %v892 = vld [vmem:[%s886 + $0x28] sm:$0xff]
    %v893 = vld [vmem:[%s886 + $0x30] sm:$0xff]
    %v894 = vld [vmem:[%s886 + $0x38] sm:$0xff]
    %v895 = vld [vmem:[%s886 + $0x40] sm:$0xff]
    %v896 = vld [vmem:[%s886 + $0x48] sm:$0xff]
    %v897 = vld [vmem:[%s886 + $0x50] sm:$0xff]
    %v898 = vld [vmem:[%s886 + $0x58] sm:$0xff]
    %v899 = vld [vmem:[%s886 + $0x60] sm:$0xff]
    %v900 = vld [vmem:[%s886 + $0x68] sm:$0xff]
    %v901 = vld [vmem:[%s886 + $0x70] sm:$0xff]
    %v902 = vld [vmem:[%s886 + $0x78] sm:$0xff]
    %903 = vmatprep.subr.mxu0 0.0
    %904 = vmatpush1.msra.mxu0 %v902
    %905 = vmatprep.subr.mxu0 0.0
    %906 = vmatpush1.msra.mxu0 %v901
    %907 = vmatprep.subr.mxu0 0.0
    %908 = vmatpush1.msra.mxu0 %v900
    %909 = vmatprep.subr.mxu0 0.0
    %910 = vmatpush1.msra.mxu0 %v899
    %911 = vmatprep.subr.mxu0 0.0
    %912 = vmatpush1.msra.mxu0 %v898
    %913 = vmatprep.subr.mxu0 0.0
    %914 = vmatpush1.msra.mxu0 %v897
    %915 = vmatprep.subr.mxu0 0.0
    %916 = vmatpush1.msra.mxu0 %v896
    %917 = vmatprep.subr.mxu0 0.0
    %918 = vmatpush1.msra.mxu0 %v895
    %919 = vmatprep.subr.mxu0 0.0
    %920 = vmatpush1.msra.mxu0 %v894
    %921 = vmatprep.subr.mxu0 0.0
    %922 = vmatpush1.msra.mxu0 %v893
    %923 = vmatprep.subr.mxu0 0.0
    %924 = vmatpush1.msra.mxu0 %v892
    %925 = vmatprep.subr.mxu0 0.0
    %926 = vmatpush1.msra.mxu0 %v891
    %927 = vmatprep.subr.mxu0 0.0
    %928 = vmatpush1.msra.mxu0 %v890
    %929 = vmatprep.subr.mxu0 0.0
    %930 = vmatpush1.msra.mxu0 %v889
    %931 = vmatprep.subr.mxu0 0.0
    %932 = vmatpush1.msra.mxu0 %v888
    %933 = vmatprep.subr.mxu0 0.0
    %934 = vmatpush1.msra.mxu0 %v887
    %935 = vmatprep.subr.mxu0 0.0
    %936 = vmatpush2.msra.mxu0 0.0
    %937 = vmatprep.subr.mxu0 0.0
    %938 = vmatpush2.msra.mxu0 0.0
    %939 = vmatprep.subr.mxu0 0.0
    %940 = vmatpush2.msra.mxu0 0.0
    %941 = vmatprep.subr.mxu0 0.0
    %942 = vmatpush2.msra.mxu0 0.0
    %943 = vmatprep.subr.mxu0 0.0
    %944 = vmatpush2.msra.mxu0 0.0
    %945 = vmatprep.subr.mxu0 0.0
    %946 = vmatpush2.msra.mxu0 0.0
    %947 = vmatprep.subr.mxu0 0.0
    %948 = vmatpush2.msra.mxu0 0.0
    %949 = vmatprep.subr.mxu0 0.0
    %950 = vmatpush2.msra.mxu0 0.0
    %951 = vmatprep.subr.mxu0 0.0
    %952 = vmatpush2.msra.mxu0 0.0
    %953 = vmatprep.subr.mxu0 0.0
    %954 = vmatpush2.msra.mxu0 0.0
    %955 = vmatprep.subr.mxu0 0.0
    %956 = vmatpush2.msra.mxu0 0.0
    %957 = vmatprep.subr.mxu0 0.0
    %958 = vmatpush2.msra.mxu0 0.0
    %959 = vmatprep.subr.mxu0 0.0
    %960 = vmatpush2.msra.mxu0 0.0
    %961 = vmatprep.subr.mxu0 0.0
    %962 = vmatpush2.msra.mxu0 0.0
    %963 = vmatprep.subr.mxu0 0.0
    %964 = vmatpush2.msra.mxu0 0.0
    %965 = vmatprep.subr.mxu0 0.0
    %966 = vmatpush2.msra.mxu0 0.0
    %967 = vmatprep.mubr.f32.mxu0 0.0
    %968 = vmatmul.mubr.f32.gmra.mxu0 %v679
    %v969 = vpop.f32.mrf.mxu0
    %v970 = vadd.f32 0.0, %v969
    %v971 = vpop.f32.mrf.mxu0
    %972 = vmatprep.mubr.f32.mxu0 0.0
    %973 = vmatmul.mubr.f32.gmra.mxu0 %v680
    %v974 = vpop.f32.mrf.mxu0
    %v975 = vadd.f32 0.0, %v974
    %v976 = vpop.f32.mrf.mxu0
    %977 = vmatprep.mubr.f32.mxu0 0.0
    %978 = vmatmul.mubr.f32.gmra.mxu0 %v681
    %v979 = vpop.f32.mrf.mxu0
    %v980 = vadd.f32 0.0, %v979
    %v981 = vpop.f32.mrf.mxu0
    %982 = vmatprep.mubr.f32.mxu0 0.0
    %983 = vmatmul.mubr.f32.gmra.mxu0 %v682
    %v984 = vpop.f32.mrf.mxu0
    %v985 = vadd.f32 0.0, %v984
    %v986 = vpop.f32.mrf.mxu0
    %987 = vdwg.mxu0
    %v988 = vadd.f32 %v868, %v970
    %v989 = vadd.f32 %v873, %v975
    %v990 = vadd.f32 %v878, %v980
    %v991 = vadd.f32 %v883, %v985
    %v992 = vld [vmem:[%s11] sm:$0x1]
    %v993 = vld [vmem:[%s12] sm:$0x1]
    %994 = vmatprep.subr.mxu0 0.0
    %995 = vmatpush1.msra.mxu0 %v94
    %996 = vmatprep.subr.mxu0 0.0
    %997 = vmatpush1.msra.mxu0 %v93
    %998 = vmatprep.subr.mxu0 0.0
    %999 = vmatpush1.msra.mxu0 %v92
    %1000 = vmatprep.subr.mxu0 0.0
    %1001 = vmatpush1.msra.mxu0 %v91
    %1002 = vmatprep.subr.mxu0 0.0
    %1003 = vmatpush1.msra.mxu0 %v90
    %1004 = vmatprep.subr.mxu0 0.0
    %1005 = vmatpush1.msra.mxu0 %v89
    %1006 = vmatprep.subr.mxu0 0.0
    %1007 = vmatpush1.msra.mxu0 %v88
    %1008 = vmatprep.subr.mxu0 0.0
    %1009 = vmatpush1.msra.mxu0 %v87
    %1010 = vmatprep.subr.mxu0 0.0
    %1011 = vmatpush1.msra.mxu0 %v86
    %1012 = vmatprep.subr.mxu0 0.0
    %1013 = vmatpush1.msra.mxu0 %v85
    %1014 = vmatprep.subr.mxu0 0.0
    %1015 = vmatpush1.msra.mxu0 %v84
    %1016 = vmatprep.subr.mxu0 0.0
    %1017 = vmatpush1.msra.mxu0 %v83
    %1018 = vmatprep.subr.mxu0 0.0
    %1019 = vmatpush1.msra.mxu0 %v82
    %1020 = vmatprep.subr.mxu0 0.0
    %1021 = vmatpush1.msra.mxu0 %v81
    %1022 = vmatprep.subr.mxu0 0.0
    %1023 = vmatpush1.msra.mxu0 %v80
    %1024 = vmatprep.subr.mxu0 0.0
    %1025 = vmatpush1.msra.mxu0 %v79
    %1026 = vmatprep.subr.mxu0 0.0
    %1027 = vmatpush2.msra.mxu0 0.0
    %1028 = vmatprep.subr.mxu0 0.0
    %1029 = vmatpush2.msra.mxu0 0.0
    %1030 = vmatprep.subr.mxu0 0.0
    %1031 = vmatpush2.msra.mxu0 0.0
    %1032 = vmatprep.subr.mxu0 0.0
    %1033 = vmatpush2.msra.mxu0 0.0
    %1034 = vmatprep.subr.mxu0 0.0
    %1035 = vmatpush2.msra.mxu0 0.0
    %1036 = vmatprep.subr.mxu0 0.0
    %1037 = vmatpush2.msra.mxu0 0.0
    %1038 = vmatprep.subr.mxu0 0.0
    %1039 = vmatpush2.msra.mxu0 0.0
    %1040 = vmatprep.subr.mxu0 0.0
    %1041 = vmatpush2.msra.mxu0 0.0
    %1042 = vmatprep.subr.mxu0 0.0
    %1043 = vmatpush2.msra.mxu0 0.0
    %1044 = vmatprep.subr.mxu0 0.0
    %1045 = vmatpush2.msra.mxu0 0.0
    %1046 = vmatprep.subr.mxu0 0.0
    %1047 = vmatpush2.msra.mxu0 0.0
    %1048 = vmatprep.subr.mxu0 0.0
    %1049 = vmatpush2.msra.mxu0 0.0
    %1050 = vmatprep.subr.mxu0 0.0
    %1051 = vmatpush2.msra.mxu0 0.0
    %1052 = vmatprep.subr.mxu0 0.0
    %1053 = vmatpush2.msra.mxu0 0.0
    %1054 = vmatprep.subr.mxu0 0.0
    %1055 = vmatpush2.msra.mxu0 0.0
    %1056 = vmatprep.subr.mxu0 0.0
    %1057 = vmatpush2.msra.mxu0 0.0
    %1058 = vmatprep.mubr.f32.mxu0 0.0
    %1059 = vmatmul.mubr.f32.gmra.mxu0 %v988
    %v1060 = vpop.f32.mrf.mxu0
    %v1061 = vadd.f32 0.0, %v1060
    %v1062 = vpop.f32.mrf.mxu0
    %1063 = vmatprep.mubr.f32.mxu0 0.0
    %1064 = vmatmul.mubr.f32.gmra.mxu0 %v989
    %v1065 = vpop.f32.mrf.mxu0
    %v1066 = vadd.f32 0.0, %v1065
    %v1067 = vpop.f32.mrf.mxu0
    %1068 = vmatprep.mubr.f32.mxu0 0.0
    %1069 = vmatmul.mubr.f32.gmra.mxu0 %v990
    %v1070 = vpop.f32.mrf.mxu0
    %v1071 = vadd.f32 0.0, %v1070
    %v1072 = vpop.f32.mrf.mxu0
    %1073 = vmatprep.mubr.f32.mxu0 0.0
    %1074 = vmatmul.mubr.f32.gmra.mxu0 %v991
    %v1075 = vpop.f32.mrf.mxu0
    %v1076 = vadd.f32 0.0, %v1075
    %v1077 = vpop.f32.mrf.mxu0
    %1078 = vdwg.mxu0
    %v1079 = vmul.f32 %v988, %v988
    %v1080 = vmul.f32 %v989, %v989
    %v1081 = vmul.f32 %v990, %v990
    %v1082 = vmul.f32 %v991, %v991
    %1083 = vmatprep.subr.mxu0 0.0
    %1084 = vmatpush1.msra.mxu0 %v94
    %1085 = vmatprep.subr.mxu0 0.0
    %1086 = vmatpush1.msra.mxu0 %v93
    %1087 = vmatprep.subr.mxu0 0.0
    %1088 = vmatpush1.msra.mxu0 %v92
    %1089 = vmatprep.subr.mxu0 0.0
    %1090 = vmatpush1.msra.mxu0 %v91
    %1091 = vmatprep.subr.mxu0 0.0
    %1092 = vmatpush1.msra.mxu0 %v90
    %1093 = vmatprep.subr.mxu0 0.0
    %1094 = vmatpush1.msra.mxu0 %v89
    %1095 = vmatprep.subr.mxu0 0.0
    %1096 = vmatpush1.msra.mxu0 %v88
    %1097 = vmatprep.subr.mxu0 0.0
    %1098 = vmatpush1.msra.mxu0 %v87
    %1099 = vmatprep.subr.mxu0 0.0
    %1100 = vmatpush1.msra.mxu0 %v86
    %1101 = vmatprep.subr.mxu0 0.0
    %1102 = vmatpush1.msra.mxu0 %v85
    %1103 = vmatprep.subr.mxu0 0.0
    %1104 = vmatpush1.msra.mxu0 %v84
    %1105 = vmatprep.subr.mxu0 0.0
    %1106 = vmatpush1.msra.mxu0 %v83
    %1107 = vmatprep.subr.mxu0 0.0
    %1108 = vmatpush1.msra.mxu0 %v82
    %1109 = vmatprep.subr.mxu0 0.0
    %1110 = vmatpush1.msra.mxu0 %v81
    %1111 = vmatprep.subr.mxu0 0.0
    %1112 = vmatpush1.msra.mxu0 %v80
    %1113 = vmatprep.subr.mxu0 0.0
    %1114 = vmatpush1.msra.mxu0 %v79
    %1115 = vmatprep.subr.mxu0 0.0
    %1116 = vmatpush2.msra.mxu0 0.0
    %1117 = vmatprep.subr.mxu0 0.0
    %1118 = vmatpush2.msra.mxu0 0.0
    %1119 = vmatprep.subr.mxu0 0.0
    %1120 = vmatpush2.msra.mxu0 0.0
    %1121 = vmatprep.subr.mxu0 0.0
    %1122 = vmatpush2.msra.mxu0 0.0
    %1123 = vmatprep.subr.mxu0 0.0
    %1124 = vmatpush2.msra.mxu0 0.0
    %1125 = vmatprep.subr.mxu0 0.0
    %1126 = vmatpush2.msra.mxu0 0.0
    %1127 = vmatprep.subr.mxu0 0.0
    %1128 = vmatpush2.msra.mxu0 0.0
    %1129 = vmatprep.subr.mxu0 0.0
    %1130 = vmatpush2.msra.mxu0 0.0
    %1131 = vmatprep.subr.mxu0 0.0
    %1132 = vmatpush2.msra.mxu0 0.0
    %1133 = vmatprep.subr.mxu0 0.0
    %1134 = vmatpush2.msra.mxu0 0.0
    %1135 = vmatprep.subr.mxu0 0.0
    %1136 = vmatpush2.msra.mxu0 0.0
    %1137 = vmatprep.subr.mxu0 0.0
    %1138 = vmatpush2.msra.mxu0 0.0
    %1139 = vmatprep.subr.mxu0 0.0
    %1140 = vmatpush2.msra.mxu0 0.0
    %1141 = vmatprep.subr.mxu0 0.0
    %1142 = vmatpush2.msra.mxu0 0.0
    %1143 = vmatprep.subr.mxu0 0.0
    %1144 = vmatpush2.msra.mxu0 0.0
    %1145 = vmatprep.subr.mxu0 0.0
    %1146 = vmatpush2.msra.mxu0 0.0
    %1147 = vmatprep.mubr.f32.mxu0 0.0
    %1148 = vmatmul.mubr.f32.gmra.mxu0 %v1079
    %v1149 = vpop.f32.mrf.mxu0
    %v1150 = vadd.f32 0.0, %v1149
    %v1151 = vpop.f32.mrf.mxu0
    %1152 = vmatprep.mubr.f32.mxu0 0.0
    %1153 = vmatmul.mubr.f32.gmra.mxu0 %v1080
    %v1154 = vpop.f32.mrf.mxu0
    %v1155 = vadd.f32 0.0, %v1154
    %v1156 = vpop.f32.mrf.mxu0
    %1157 = vmatprep.mubr.f32.mxu0 0.0
    %1158 = vmatmul.mubr.f32.gmra.mxu0 %v1081
    %v1159 = vpop.f32.mrf.mxu0
    %v1160 = vadd.f32 0.0, %v1159
    %v1161 = vpop.f32.mrf.mxu0
    %1162 = vmatprep.mubr.f32.mxu0 0.0
    %1163 = vmatmul.mubr.f32.gmra.mxu0 %v1082
    %v1164 = vpop.f32.mrf.mxu0
    %v1165 = vadd.f32 0.0, %v1164
    %v1166 = vpop.f32.mrf.mxu0
    %1167 = vdwg.mxu0
    %v1168 = vsel %vm405, %v1061, 0.0
    %v1169 = vsel %vm405, %v1066, 0.0
    %v1170 = vadd.f32 %v1168, %v1169
    %v1171 = vsel %vm405, %v1071, 0.0
    %v1172 = vadd.f32 %v1170, %v1171
    %v1173 = vsel %vm405, %v1076, 0.0
    %v1174 = vadd.f32 %v1172, %v1173
    %v1175 = vrot.slane %v1174, 4
    %v1176 = vadd.f32 %v1174, %v1175
    %v1177 = vrot.slane %v1176, 2
    %v1178 = vadd.f32 %v1176, %v1177
    %v1179 = vrot.slane %v1178, 1
    %v1180 = vadd.f32 %v1178, %v1179
    %v1181 = vmul.f32 %v1180, 0.001953125
    %v1182 = vsel %vm405, %v1150, 0.0
    %v1183 = vsel %vm405, %v1155, 0.0
    %v1184 = vadd.f32 %v1182, %v1183
    %v1185 = vsel %vm405, %v1160, 0.0
    %v1186 = vadd.f32 %v1184, %v1185
    %v1187 = vsel %vm405, %v1165, 0.0
    %v1188 = vadd.f32 %v1186, %v1187
    %v1189 = vrot.slane %v1188, 4
    %v1190 = vadd.f32 %v1188, %v1189
    %v1191 = vrot.slane %v1190, 2
    %v1192 = vadd.f32 %v1190, %v1191
    %v1193 = vrot.slane %v1192, 1
    %v1194 = vadd.f32 %v1192, %v1193
    %v1195 = vmul.f32 %v1194, 0.001953125
    %v1196 = vmul.f32 %v1181, %v1181
    %v1197 = vsub.f32 %v1195, %v1196
    %v1198 = vadd.f32 %v1197, 1e-05
    %v1199 = vrsqrt.pop %v1198
    %v1200 = vmul.f32 %v1199, %v992
    %v1201 = vmul.f32 %v1181, %v1200
    %v1202 = vsub.f32 %v993, %v1201
    %v1204 = vsel %vm405, %v1200, 0
    %1206 = vmatprep.subr.mxu0 0.0
    %1207 = vmatpush1.msra.mxu0 0.0
    %1208 = vmatprep.subr.mxu0 0.0
    %1209 = vmatpush1.msra.mxu0 0.0
    %1210 = vmatprep.subr.mxu0 0.0
    %1211 = vmatpush1.msra.mxu0 0.0
    %1212 = vmatprep.subr.mxu0 0.0
    %1213 = vmatpush1.msra.mxu0 0.0
    %1214 = vmatprep.subr.mxu0 0.0
    %1215 = vmatpush1.msra.mxu0 0.0
    %1216 = vmatprep.subr.mxu0 0.0
    %1217 = vmatpush1.msra.mxu0 0.0
    %1218 = vmatprep.subr.mxu0 0.0
    %1219 = vmatpush1.msra.mxu0 0.0
    %1220 = vmatprep.subr.mxu0 0.0
    %1221 = vmatpush1.msra.mxu0 0.0
    %1222 = vmatprep.subr.mxu0 0.0
    %1223 = vmatpush1.msra.mxu0 0.0
    %1224 = vmatprep.subr.mxu0 0.0
    %1225 = vmatpush1.msra.mxu0 0.0
    %1226 = vmatprep.subr.mxu0 0.0
    %1227 = vmatpush1.msra.mxu0 0.0
    %1228 = vmatprep.subr.mxu0 0.0
    %1229 = vmatpush1.msra.mxu0 0.0
    %1230 = vmatprep.subr.mxu0 0.0
    %1231 = vmatpush1.msra.mxu0 0.0
    %1232 = vmatprep.subr.mxu0 0.0
    %1233 = vmatpush1.msra.mxu0 0.0
    %1234 = vmatprep.subr.mxu0 0.0
    %1235 = vmatpush1.msra.mxu0 0.0
    %1236 = vmatprep.subr.mxu0 0.0
    %1237 = vmatpush1.msra.mxu0 %v95
    %1238 = vmatprep.subr.mxu0 0.0
    %1239 = vmatpush2.msra.mxu0 0.0
    %1240 = vmatprep.subr.mxu0 0.0
    %1241 = vmatpush2.msra.mxu0 0.0
    %1242 = vmatprep.subr.mxu0 0.0
    %1243 = vmatpush2.msra.mxu0 0.0
    %1244 = vmatprep.subr.mxu0 0.0
    %1245 = vmatpush2.msra.mxu0 0.0
    %1246 = vmatprep.subr.mxu0 0.0
    %1247 = vmatpush2.msra.mxu0 0.0
    %1248 = vmatprep.subr.mxu0 0.0
    %1249 = vmatpush2.msra.mxu0 0.0
    %1250 = vmatprep.subr.mxu0 0.0
    %1251 = vmatpush2.msra.mxu0 0.0
    %1252 = vmatprep.subr.mxu0 0.0
    %1253 = vmatpush2.msra.mxu0 0.0
    %1254 = vmatprep.subr.mxu0 0.0
    %1255 = vmatpush2.msra.mxu0 0.0
    %1256 = vmatprep.subr.mxu0 0.0
    %1257 = vmatpush2.msra.mxu0 0.0
    %1258 = vmatprep.subr.mxu0 0.0
    %1259 = vmatpush2.msra.mxu0 0.0
    %1260 = vmatprep.subr.mxu0 0.0
    %1261 = vmatpush2.msra.mxu0 0.0
    %1262 = vmatprep.subr.mxu0 0.0
    %1263 = vmatpush2.msra.mxu0 0.0
    %1264 = vmatprep.subr.mxu0 0.0
    %1265 = vmatpush2.msra.mxu0 0.0
    %1266 = vmatprep.subr.mxu0 0.0
    %1267 = vmatpush2.msra.mxu0 0.0
    %1268 = vmatprep.subr.mxu0 0.0
    %1269 = vmatpush2.msra.mxu0 0.0
    %1270 = vmatprep.mubr.f32.mxu0 0.0
    %1271 = vmatmul.mubr.f32.gmra.mxu0 %v1204
    %v1272 = vpop.f32.mrf.mxu0
    %v1273 = vadd.f32 0.0, %v1272
    %v1274 = vpop.f32.mrf.mxu0
    %1275 = vdwg.mxu0
    %v1277 = vsel %vm405, %v1202, 0
    %1279 = vmatprep.subr.mxu0 0.0
    %1280 = vmatpush1.msra.mxu0 0.0
    %1281 = vmatprep.subr.mxu0 0.0
    %1282 = vmatpush1.msra.mxu0 0.0
    %1283 = vmatprep.subr.mxu0 0.0
    %1284 = vmatpush1.msra.mxu0 0.0
    %1285 = vmatprep.subr.mxu0 0.0
    %1286 = vmatpush1.msra.mxu0 0.0
    %1287 = vmatprep.subr.mxu0 0.0
    %1288 = vmatpush1.msra.mxu0 0.0
    %1289 = vmatprep.subr.mxu0 0.0
    %1290 = vmatpush1.msra.mxu0 0.0
    %1291 = vmatprep.subr.mxu0 0.0
    %1292 = vmatpush1.msra.mxu0 0.0
    %1293 = vmatprep.subr.mxu0 0.0
    %1294 = vmatpush1.msra.mxu0 0.0
    %1295 = vmatprep.subr.mxu0 0.0
    %1296 = vmatpush1.msra.mxu0 0.0
    %1297 = vmatprep.subr.mxu0 0.0
    %1298 = vmatpush1.msra.mxu0 0.0
    %1299 = vmatprep.subr.mxu0 0.0
    %1300 = vmatpush1.msra.mxu0 0.0
    %1301 = vmatprep.subr.mxu0 0.0
    %1302 = vmatpush1.msra.mxu0 0.0
    %1303 = vmatprep.subr.mxu0 0.0
    %1304 = vmatpush1.msra.mxu0 0.0
    %1305 = vmatprep.subr.mxu0 0.0
    %1306 = vmatpush1.msra.mxu0 0.0
    %1307 = vmatprep.subr.mxu0 0.0
    %1308 = vmatpush1.msra.mxu0 0.0
    %1309 = vmatprep.subr.mxu0 0.0
    %1310 = vmatpush1.msra.mxu0 %v95
    %1311 = vmatprep.subr.mxu0 0.0
    %1312 = vmatpush2.msra.mxu0 0.0
    %1313 = vmatprep.subr.mxu0 0.0
    %1314 = vmatpush2.msra.mxu0 0.0
    %1315 = vmatprep.subr.mxu0 0.0
    %1316 = vmatpush2.msra.mxu0 0.0
    %1317 = vmatprep.subr.mxu0 0.0
    %1318 = vmatpush2.msra.mxu0 0.0
    %1319 = vmatprep.subr.mxu0 0.0
    %1320 = vmatpush2.msra.mxu0 0.0
    %1321 = vmatprep.subr.mxu0 0.0
    %1322 = vmatpush2.msra.mxu0 0.0
    %1323 = vmatprep.subr.mxu0 0.0
    %1324 = vmatpush2.msra.mxu0 0.0
    %1325 = vmatprep.subr.mxu0 0.0
    %1326 = vmatpush2.msra.mxu0 0.0
    %1327 = vmatprep.subr.mxu0 0.0
    %1328 = vmatpush2.msra.mxu0 0.0
    %1329 = vmatprep.subr.mxu0 0.0
    %1330 = vmatpush2.msra.mxu0 0.0
    %1331 = vmatprep.subr.mxu0 0.0
    %1332 = vmatpush2.msra.mxu0 0.0
    %1333 = vmatprep.subr.mxu0 0.0
    %1334 = vmatpush2.msra.mxu0 0.0
    %1335 = vmatprep.subr.mxu0 0.0
    %1336 = vmatpush2.msra.mxu0 0.0
    %1337 = vmatprep.subr.mxu0 0.0
    %1338 = vmatpush2.msra.mxu0 0.0
    %1339 = vmatprep.subr.mxu0 0.0
    %1340 = vmatpush2.msra.mxu0 0.0
    %1341 = vmatprep.subr.mxu0 0.0
    %1342 = vmatpush2.msra.mxu0 0.0
    %1343 = vmatprep.mubr.f32.mxu0 0.0
    %1344 = vmatmul.mubr.f32.gmra.mxu0 %v1277
    %v1345 = vpop.f32.mrf.mxu0
    %v1346 = vadd.f32 0.0, %v1345
    %v1347 = vpop.f32.mrf.mxu0
    %1348 = vdwg.mxu0
    %v1349 = vlaneseq
    %v1350 = vshrl.u32 %v1349, 7
    %v1351 = vsub.s32 0, %v1350
    %v1352 = vrot.slane %v1273, %v1351
    %v1353 = vmul.f32 %v988, %v1352
    %v1354 = vmul.f32 %v989, %v1352
    %v1355 = vmul.f32 %v990, %v1352
    %v1356 = vmul.f32 %v991, %v1352
    %v1357 = vlaneseq
    %v1358 = vshrl.u32 %v1357, 7
    %v1359 = vsub.s32 0, %v1358
    %v1360 = vrot.slane %v1346, %v1359
    %v1361 = vadd.f32 %v1353, %v1360
    %v1362 = vadd.f32 %v1354, %v1360
    %v1363 = vadd.f32 %v1355, %v1360
    %v1364 = vadd.f32 %v1356, %v1360
    %v1365 = vld [vmem:[%s1] sm:$0xff]
    %v1366 = vld [vmem:[%s1 + $0x8] sm:$0xff]
    %v1367 = vld [vmem:[%s1 + $0x10] sm:$0xff]
    %v1368 = vld [vmem:[%s1 + $0x18] sm:$0xff]
    %v1369 = vld [vmem:[%s4] sm:$0xff]
    %v1370 = vld [vmem:[%s4 + $0x8] sm:$0xff]
    %v1371 = vld [vmem:[%s4 + $0x10] sm:$0xff]
    %v1372 = vld [vmem:[%s4 + $0x18] sm:$0xff]
    %v1373 = vld [vmem:[%s4 + $0x20] sm:$0xff]
    %v1374 = vld [vmem:[%s4 + $0x28] sm:$0xff]
    %v1375 = vld [vmem:[%s4 + $0x30] sm:$0xff]
    %v1376 = vld [vmem:[%s4 + $0x38] sm:$0xff]
    %vm1377 = vcmask 523264
    %v1379 = vsel %vm1377, %v1365, 0
    %v1382 = vsel %vm1377, %v1366, 0
    %v1385 = vsel %vm1377, %v1367, 0
    %v1388 = vsel %vm1377, %v1368, 0
    %1390 = vmatprep.subr.mxu0 0.0
    %1391 = vmatpush1.msra.mxu0 0.0
    %1392 = vmatprep.subr.mxu0 0.0
    %1393 = vmatpush1.msra.mxu0 0.0
    %1394 = vmatprep.subr.mxu0 0.0
    %1395 = vmatpush1.msra.mxu0 0.0
    %1396 = vmatprep.subr.mxu0 0.0
    %1397 = vmatpush1.msra.mxu0 0.0
    %1398 = vmatprep.subr.mxu0 0.0
    %1399 = vmatpush1.msra.mxu0 0.0
    %1400 = vmatprep.subr.mxu0 0.0
    %1401 = vmatpush1.msra.mxu0 0.0
    %1402 = vmatprep.subr.mxu0 0.0
    %1403 = vmatpush1.msra.mxu0 0.0
    %1404 = vmatprep.subr.mxu0 0.0
    %1405 = vmatpush1.msra.mxu0 0.0
    %1406 = vmatprep.subr.mxu0 0.0
    %1407 = vmatpush1.msra.mxu0 %v1376
    %1408 = vmatprep.subr.mxu0 0.0
    %1409 = vmatpush1.msra.mxu0 %v1375
    %1410 = vmatprep.subr.mxu0 0.0
    %1411 = vmatpush1.msra.mxu0 %v1374
    %1412 = vmatprep.subr.mxu0 0.0
    %1413 = vmatpush1.msra.mxu0 %v1373
    %1414 = vmatprep.subr.mxu0 0.0
    %1415 = vmatpush1.msra.mxu0 %v1372
    %1416 = vmatprep.subr.mxu0 0.0
    %1417 = vmatpush1.msra.mxu0 %v1371
    %1418 = vmatprep.subr.mxu0 0.0
    %1419 = vmatpush1.msra.mxu0 %v1370
    %1420 = vmatprep.subr.mxu0 0.0
    %1421 = vmatpush1.msra.mxu0 %v1369
    %1422 = vmatprep.subr.mxu0 0.0
    %1423 = vmatpush2.msra.mxu0 0.0
    %1424 = vmatprep.subr.mxu0 0.0
    %1425 = vmatpush2.msra.mxu0 0.0
    %1426 = vmatprep.subr.mxu0 0.0
    %1427 = vmatpush2.msra.mxu0 0.0
    %1428 = vmatprep.subr.mxu0 0.0
    %1429 = vmatpush2.msra.mxu0 0.0
    %1430 = vmatprep.subr.mxu0 0.0
    %1431 = vmatpush2.msra.mxu0 0.0
    %1432 = vmatprep.subr.mxu0 0.0
    %1433 = vmatpush2.msra.mxu0 0.0
    %1434 = vmatprep.subr.mxu0 0.0
    %1435 = vmatpush2.msra.mxu0 0.0
    %1436 = vmatprep.subr.mxu0 0.0
    %1437 = vmatpush2.msra.mxu0 0.0
    %1438 = vmatprep.subr.mxu0 0.0
    %1439 = vmatpush2.msra.mxu0 0.0
    %1440 = vmatprep.subr.mxu0 0.0
    %1441 = vmatpush2.msra.mxu0 0.0
    %1442 = vmatprep.subr.mxu0 0.0
    %1443 = vmatpush2.msra.mxu0 0.0
    %1444 = vmatprep.subr.mxu0 0.0
    %1445 = vmatpush2.msra.mxu0 0.0
    %1446 = vmatprep.subr.mxu0 0.0
    %1447 = vmatpush2.msra.mxu0 0.0
    %1448 = vmatprep.subr.mxu0 0.0
    %1449 = vmatpush2.msra.mxu0 0.0
    %1450 = vmatprep.subr.mxu0 0.0
    %1451 = vmatpush2.msra.mxu0 0.0
    %1452 = vmatprep.subr.mxu0 0.0
    %1453 = vmatpush2.msra.mxu0 0.0
    %1454 = vmatprep.mubr.f32.mxu0 0.0
    %1455 = vmatmul.mubr.f32.gmra.mxu0 %v1379
    %v1456 = vpop.f32.mrf.mxu0
    %v1457 = vadd.f32 0.0, %v1456
    %v1458 = vpop.f32.mrf.mxu0
    %1459 = vmatprep.mubr.f32.mxu0 0.0
    %1460 = vmatmul.mubr.f32.gmra.mxu0 %v1382
    %v1461 = vpop.f32.mrf.mxu0
    %v1462 = vadd.f32 0.0, %v1461
    %v1463 = vpop.f32.mrf.mxu0
    %1464 = vmatprep.mubr.f32.mxu0 0.0
    %1465 = vmatmul.mubr.f32.gmra.mxu0 %v1385
    %v1466 = vpop.f32.mrf.mxu0
    %v1467 = vadd.f32 0.0, %v1466
    %v1468 = vpop.f32.mrf.mxu0
    %1469 = vmatprep.mubr.f32.mxu0 0.0
    %1470 = vmatmul.mubr.f32.gmra.mxu0 %v1388
    %v1471 = vpop.f32.mrf.mxu0
    %v1472 = vadd.f32 0.0, %v1471
    %v1473 = vpop.f32.mrf.mxu0
    %1474 = vdwg.mxu0
    %v1475 = vld [vmem:[%s13] sm:$0x1]
    %v1476 = vld [vmem:[%s14] sm:$0x1]
    %1477 = vmatprep.subr.mxu0 0.0
    %1478 = vmatpush1.msra.mxu0 %v94
    %1479 = vmatprep.subr.mxu0 0.0
    %1480 = vmatpush1.msra.mxu0 %v93
    %1481 = vmatprep.subr.mxu0 0.0
    %1482 = vmatpush1.msra.mxu0 %v92
    %1483 = vmatprep.subr.mxu0 0.0
    %1484 = vmatpush1.msra.mxu0 %v91
    %1485 = vmatprep.subr.mxu0 0.0
    %1486 = vmatpush1.msra.mxu0 %v90
    %1487 = vmatprep.subr.mxu0 0.0
    %1488 = vmatpush1.msra.mxu0 %v89
    %1489 = vmatprep.subr.mxu0 0.0
    %1490 = vmatpush1.msra.mxu0 %v88
    %1491 = vmatprep.subr.mxu0 0.0
    %1492 = vmatpush1.msra.mxu0 %v87
    %1493 = vmatprep.subr.mxu0 0.0
    %1494 = vmatpush1.msra.mxu0 %v86
    %1495 = vmatprep.subr.mxu0 0.0
    %1496 = vmatpush1.msra.mxu0 %v85
    %1497 = vmatprep.subr.mxu0 0.0
    %1498 = vmatpush1.msra.mxu0 %v84
    %1499 = vmatprep.subr.mxu0 0.0
    %1500 = vmatpush1.msra.mxu0 %v83
    %1501 = vmatprep.subr.mxu0 0.0
    %1502 = vmatpush1.msra.mxu0 %v82
    %1503 = vmatprep.subr.mxu0 0.0
    %1504 = vmatpush1.msra.mxu0 %v81
    %1505 = vmatprep.subr.mxu0 0.0
    %1506 = vmatpush1.msra.mxu0 %v80
    %1507 = vmatprep.subr.mxu0 0.0
    %1508 = vmatpush1.msra.mxu0 %v79
    %1509 = vmatprep.subr.mxu0 0.0
    %1510 = vmatpush2.msra.mxu0 0.0
    %1511 = vmatprep.subr.mxu0 0.0
    %1512 = vmatpush2.msra.mxu0 0.0
    %1513 = vmatprep.subr.mxu0 0.0
    %1514 = vmatpush2.msra.mxu0 0.0
    %1515 = vmatprep.subr.mxu0 0.0
    %1516 = vmatpush2.msra.mxu0 0.0
    %1517 = vmatprep.subr.mxu0 0.0
    %1518 = vmatpush2.msra.mxu0 0.0
    %1519 = vmatprep.subr.mxu0 0.0
    %1520 = vmatpush2.msra.mxu0 0.0
    %1521 = vmatprep.subr.mxu0 0.0
    %1522 = vmatpush2.msra.mxu0 0.0
    %1523 = vmatprep.subr.mxu0 0.0
    %1524 = vmatpush2.msra.mxu0 0.0
    %1525 = vmatprep.subr.mxu0 0.0
    %1526 = vmatpush2.msra.mxu0 0.0
    %1527 = vmatprep.subr.mxu0 0.0
    %1528 = vmatpush2.msra.mxu0 0.0
    %1529 = vmatprep.subr.mxu0 0.0
    %1530 = vmatpush2.msra.mxu0 0.0
    %1531 = vmatprep.subr.mxu0 0.0
    %1532 = vmatpush2.msra.mxu0 0.0
    %1533 = vmatprep.subr.mxu0 0.0
    %1534 = vmatpush2.msra.mxu0 0.0
    %1535 = vmatprep.subr.mxu0 0.0
    %1536 = vmatpush2.msra.mxu0 0.0
    %1537 = vmatprep.subr.mxu0 0.0
    %1538 = vmatpush2.msra.mxu0 0.0
    %1539 = vmatprep.subr.mxu0 0.0
    %1540 = vmatpush2.msra.mxu0 0.0
    %1541 = vmatprep.mubr.f32.mxu0 0.0
    %1542 = vmatmul.mubr.f32.gmra.mxu0 %v1457
    %v1543 = vpop.f32.mrf.mxu0
    %v1544 = vadd.f32 0.0, %v1543
    %v1545 = vpop.f32.mrf.mxu0
    %1546 = vmatprep.mubr.f32.mxu0 0.0
    %1547 = vmatmul.mubr.f32.gmra.mxu0 %v1462
    %v1548 = vpop.f32.mrf.mxu0
    %v1549 = vadd.f32 0.0, %v1548
    %v1550 = vpop.f32.mrf.mxu0
    %1551 = vmatprep.mubr.f32.mxu0 0.0
    %1552 = vmatmul.mubr.f32.gmra.mxu0 %v1467
    %v1553 = vpop.f32.mrf.mxu0
    %v1554 = vadd.f32 0.0, %v1553
    %v1555 = vpop.f32.mrf.mxu0
    %1556 = vmatprep.mubr.f32.mxu0 0.0
    %1557 = vmatmul.mubr.f32.gmra.mxu0 %v1472
    %v1558 = vpop.f32.mrf.mxu0
    %v1559 = vadd.f32 0.0, %v1558
    %v1560 = vpop.f32.mrf.mxu0
    %1561 = vdwg.mxu0
    %v1562 = vmul.f32 %v1457, %v1457
    %v1563 = vmul.f32 %v1462, %v1462
    %v1564 = vmul.f32 %v1467, %v1467
    %v1565 = vmul.f32 %v1472, %v1472
    %1566 = vmatprep.subr.mxu0 0.0
    %1567 = vmatpush1.msra.mxu0 %v94
    %1568 = vmatprep.subr.mxu0 0.0
    %1569 = vmatpush1.msra.mxu0 %v93
    %1570 = vmatprep.subr.mxu0 0.0
    %1571 = vmatpush1.msra.mxu0 %v92
    %1572 = vmatprep.subr.mxu0 0.0
    %1573 = vmatpush1.msra.mxu0 %v91
    %1574 = vmatprep.subr.mxu0 0.0
    %1575 = vmatpush1.msra.mxu0 %v90
    %1576 = vmatprep.subr.mxu0 0.0
    %1577 = vmatpush1.msra.mxu0 %v89
    %1578 = vmatprep.subr.mxu0 0.0
    %1579 = vmatpush1.msra.mxu0 %v88
    %1580 = vmatprep.subr.mxu0 0.0
    %1581 = vmatpush1.msra.mxu0 %v87
    %1582 = vmatprep.subr.mxu0 0.0
    %1583 = vmatpush1.msra.mxu0 %v86
    %1584 = vmatprep.subr.mxu0 0.0
    %1585 = vmatpush1.msra.mxu0 %v85
    %1586 = vmatprep.subr.mxu0 0.0
    %1587 = vmatpush1.msra.mxu0 %v84
    %1588 = vmatprep.subr.mxu0 0.0
    %1589 = vmatpush1.msra.mxu0 %v83
    %1590 = vmatprep.subr.mxu0 0.0
    %1591 = vmatpush1.msra.mxu0 %v82
    %1592 = vmatprep.subr.mxu0 0.0
    %1593 = vmatpush1.msra.mxu0 %v81
    %1594 = vmatprep.subr.mxu0 0.0
    %1595 = vmatpush1.msra.mxu0 %v80
    %1596 = vmatprep.subr.mxu0 0.0
    %1597 = vmatpush1.msra.mxu0 %v79
    %1598 = vmatprep.subr.mxu0 0.0
    %1599 = vmatpush2.msra.mxu0 0.0
    %1600 = vmatprep.subr.mxu0 0.0
    %1601 = vmatpush2.msra.mxu0 0.0
    %1602 = vmatprep.subr.mxu0 0.0
    %1603 = vmatpush2.msra.mxu0 0.0
    %1604 = vmatprep.subr.mxu0 0.0
    %1605 = vmatpush2.msra.mxu0 0.0
    %1606 = vmatprep.subr.mxu0 0.0
    %1607 = vmatpush2.msra.mxu0 0.0
    %1608 = vmatprep.subr.mxu0 0.0
    %1609 = vmatpush2.msra.mxu0 0.0
    %1610 = vmatprep.subr.mxu0 0.0
    %1611 = vmatpush2.msra.mxu0 0.0
    %1612 = vmatprep.subr.mxu0 0.0
    %1613 = vmatpush2.msra.mxu0 0.0
    %1614 = vmatprep.subr.mxu0 0.0
    %1615 = vmatpush2.msra.mxu0 0.0
    %1616 = vmatprep.subr.mxu0 0.0
    %1617 = vmatpush2.msra.mxu0 0.0
    %1618 = vmatprep.subr.mxu0 0.0
    %1619 = vmatpush2.msra.mxu0 0.0
    %1620 = vmatprep.subr.mxu0 0.0
    %1621 = vmatpush2.msra.mxu0 0.0
    %1622 = vmatprep.subr.mxu0 0.0
    %1623 = vmatpush2.msra.mxu0 0.0
    %1624 = vmatprep.subr.mxu0 0.0
    %1625 = vmatpush2.msra.mxu0 0.0
    %1626 = vmatprep.subr.mxu0 0.0
    %1627 = vmatpush2.msra.mxu0 0.0
    %1628 = vmatprep.subr.mxu0 0.0
    %1629 = vmatpush2.msra.mxu0 0.0
    %1630 = vmatprep.mubr.f32.mxu0 0.0
    %1631 = vmatmul.mubr.f32.gmra.mxu0 %v1562
    %v1632 = vpop.f32.mrf.mxu0
    %v1633 = vadd.f32 0.0, %v1632
    %v1634 = vpop.f32.mrf.mxu0
    %1635 = vmatprep.mubr.f32.mxu0 0.0
    %1636 = vmatmul.mubr.f32.gmra.mxu0 %v1563
    %v1637 = vpop.f32.mrf.mxu0
    %v1638 = vadd.f32 0.0, %v1637
    %v1639 = vpop.f32.mrf.mxu0
    %1640 = vmatprep.mubr.f32.mxu0 0.0
    %1641 = vmatmul.mubr.f32.gmra.mxu0 %v1564
    %v1642 = vpop.f32.mrf.mxu0
    %v1643 = vadd.f32 0.0, %v1642
    %v1644 = vpop.f32.mrf.mxu0
    %1645 = vmatprep.mubr.f32.mxu0 0.0
    %1646 = vmatmul.mubr.f32.gmra.mxu0 %v1565
    %v1647 = vpop.f32.mrf.mxu0
    %v1648 = vadd.f32 0.0, %v1647
    %v1649 = vpop.f32.mrf.mxu0
    %1650 = vdwg.mxu0
    %v1651 = vsel %vm405, %v1544, 0.0
    %v1652 = vsel %vm405, %v1549, 0.0
    %v1653 = vadd.f32 %v1651, %v1652
    %v1654 = vsel %vm405, %v1554, 0.0
    %v1655 = vadd.f32 %v1653, %v1654
    %v1656 = vsel %vm405, %v1559, 0.0
    %v1657 = vadd.f32 %v1655, %v1656
    %v1658 = vrot.slane %v1657, 4
    %v1659 = vadd.f32 %v1657, %v1658
    %v1660 = vrot.slane %v1659, 2
    %v1661 = vadd.f32 %v1659, %v1660
    %v1662 = vrot.slane %v1661, 1
    %v1663 = vadd.f32 %v1661, %v1662
    %v1664 = vmul.f32 %v1663, 0.001953125
    %v1665 = vsel %vm405, %v1633, 0.0
    %v1666 = vsel %vm405, %v1638, 0.0
    %v1667 = vadd.f32 %v1665, %v1666
    %v1668 = vsel %vm405, %v1643, 0.0
    %v1669 = vadd.f32 %v1667, %v1668
    %v1670 = vsel %vm405, %v1648, 0.0
    %v1671 = vadd.f32 %v1669, %v1670
    %v1672 = vrot.slane %v1671, 4
    %v1673 = vadd.f32 %v1671, %v1672
    %v1674 = vrot.slane %v1673, 2
    %v1675 = vadd.f32 %v1673, %v1674
    %v1676 = vrot.slane %v1675, 1
    %v1677 = vadd.f32 %v1675, %v1676
    %v1678 = vmul.f32 %v1677, 0.001953125
    %v1679 = vmul.f32 %v1664, %v1664
    %v1680 = vsub.f32 %v1678, %v1679
    %v1681 = vadd.f32 %v1680, 1e-05
    %v1682 = vrsqrt.pop %v1681
    %v1683 = vmul.f32 %v1682, %v1475
    %v1684 = vmul.f32 %v1664, %v1683
    %v1685 = vsub.f32 %v1476, %v1684
    %v1687 = vsel %vm405, %v1683, 0
    %1689 = vmatprep.subr.mxu0 0.0
    %1690 = vmatpush1.msra.mxu0 0.0
    %1691 = vmatprep.subr.mxu0 0.0
    %1692 = vmatpush1.msra.mxu0 0.0
    %1693 = vmatprep.subr.mxu0 0.0
    %1694 = vmatpush1.msra.mxu0 0.0
    %1695 = vmatprep.subr.mxu0 0.0
    %1696 = vmatpush1.msra.mxu0 0.0
    %1697 = vmatprep.subr.mxu0 0.0
    %1698 = vmatpush1.msra.mxu0 0.0
    %1699 = vmatprep.subr.mxu0 0.0
    %1700 = vmatpush1.msra.mxu0 0.0
    %1701 = vmatprep.subr.mxu0 0.0
    %1702 = vmatpush1.msra.mxu0 0.0
    %1703 = vmatprep.subr.mxu0 0.0
    %1704 = vmatpush1.msra.mxu0 0.0
    %1705 = vmatprep.subr.mxu0 0.0
    %1706 = vmatpush1.msra.mxu0 0.0
    %1707 = vmatprep.subr.mxu0 0.0
    %1708 = vmatpush1.msra.mxu0 0.0
    %1709 = vmatprep.subr.mxu0 0.0
    %1710 = vmatpush1.msra.mxu0 0.0
    %1711 = vmatprep.subr.mxu0 0.0
    %1712 = vmatpush1.msra.mxu0 0.0
    %1713 = vmatprep.subr.mxu0 0.0
    %1714 = vmatpush1.msra.mxu0 0.0
    %1715 = vmatprep.subr.mxu0 0.0
    %1716 = vmatpush1.msra.mxu0 0.0
    %1717 = vmatprep.subr.mxu0 0.0
    %1718 = vmatpush1.msra.mxu0 0.0
    %1719 = vmatprep.subr.mxu0 0.0
    %1720 = vmatpush1.msra.mxu0 %v95
    %1721 = vmatprep.subr.mxu0 0.0
    %1722 = vmatpush2.msra.mxu0 0.0
    %1723 = vmatprep.subr.mxu0 0.0
    %1724 = vmatpush2.msra.mxu0 0.0
    %1725 = vmatprep.subr.mxu0 0.0
    %1726 = vmatpush2.msra.mxu0 0.0
    %1727 = vmatprep.subr.mxu0 0.0
    %1728 = vmatpush2.msra.mxu0 0.0
    %1729 = vmatprep.subr.mxu0 0.0
    %1730 = vmatpush2.msra.mxu0 0.0
    %1731 = vmatprep.subr.mxu0 0.0
    %1732 = vmatpush2.msra.mxu0 0.0
    %1733 = vmatprep.subr.mxu0 0.0
    %1734 = vmatpush2.msra.mxu0 0.0
    %1735 = vmatprep.subr.mxu0 0.0
    %1736 = vmatpush2.msra.mxu0 0.0
    %1737 = vmatprep.subr.mxu0 0.0
    %1738 = vmatpush2.msra.mxu0 0.0
    %1739 = vmatprep.subr.mxu0 0.0
    %1740 = vmatpush2.msra.mxu0 0.0
    %1741 = vmatprep.subr.mxu0 0.0
    %1742 = vmatpush2.msra.mxu0 0.0
    %1743 = vmatprep.subr.mxu0 0.0
    %1744 = vmatpush2.msra.mxu0 0.0
    %1745 = vmatprep.subr.mxu0 0.0
    %1746 = vmatpush2.msra.mxu0 0.0
    %1747 = vmatprep.subr.mxu0 0.0
    %1748 = vmatpush2.msra.mxu0 0.0
    %1749 = vmatprep.subr.mxu0 0.0
    %1750 = vmatpush2.msra.mxu0 0.0
    %1751 = vmatprep.subr.mxu0 0.0
    %1752 = vmatpush2.msra.mxu0 0.0
    %1753 = vmatprep.mubr.f32.mxu0 0.0
    %1754 = vmatmul.mubr.f32.gmra.mxu0 %v1687
    %v1755 = vpop.f32.mrf.mxu0
    %v1756 = vadd.f32 0.0, %v1755
    %v1757 = vpop.f32.mrf.mxu0
    %1758 = vdwg.mxu0
    %v1760 = vsel %vm405, %v1685, 0
    %1762 = vmatprep.subr.mxu0 0.0
    %1763 = vmatpush1.msra.mxu0 0.0
    %1764 = vmatprep.subr.mxu0 0.0
    %1765 = vmatpush1.msra.mxu0 0.0
    %1766 = vmatprep.subr.mxu0 0.0
    %1767 = vmatpush1.msra.mxu0 0.0
    %1768 = vmatprep.subr.mxu0 0.0
    %1769 = vmatpush1.msra.mxu0 0.0
    %1770 = vmatprep.subr.mxu0 0.0
    %1771 = vmatpush1.msra.mxu0 0.0
    %1772 = vmatprep.subr.mxu0 0.0
    %1773 = vmatpush1.msra.mxu0 0.0
    %1774 = vmatprep.subr.mxu0 0.0
    %1775 = vmatpush1.msra.mxu0 0.0
    %1776 = vmatprep.subr.mxu0 0.0
    %1777 = vmatpush1.msra.mxu0 0.0
    %1778 = vmatprep.subr.mxu0 0.0
    %1779 = vmatpush1.msra.mxu0 0.0
    %1780 = vmatprep.subr.mxu0 0.0
    %1781 = vmatpush1.msra.mxu0 0.0
    %1782 = vmatprep.subr.mxu0 0.0
    %1783 = vmatpush1.msra.mxu0 0.0
    %1784 = vmatprep.subr.mxu0 0.0
    %1785 = vmatpush1.msra.mxu0 0.0
    %1786 = vmatprep.subr.mxu0 0.0
    %1787 = vmatpush1.msra.mxu0 0.0
    %1788 = vmatprep.subr.mxu0 0.0
    %1789 = vmatpush1.msra.mxu0 0.0
    %1790 = vmatprep.subr.mxu0 0.0
    %1791 = vmatpush1.msra.mxu0 0.0
    %1792 = vmatprep.subr.mxu0 0.0
    %1793 = vmatpush1.msra.mxu0 %v95
    %1794 = vmatprep.subr.mxu0 0.0
    %1795 = vmatpush2.msra.mxu0 0.0
    %1796 = vmatprep.subr.mxu0 0.0
    %1797 = vmatpush2.msra.mxu0 0.0
    %1798 = vmatprep.subr.mxu0 0.0
    %1799 = vmatpush2.msra.mxu0 0.0
    %1800 = vmatprep.subr.mxu0 0.0
    %1801 = vmatpush2.msra.mxu0 0.0
    %1802 = vmatprep.subr.mxu0 0.0
    %1803 = vmatpush2.msra.mxu0 0.0
    %1804 = vmatprep.subr.mxu0 0.0
    %1805 = vmatpush2.msra.mxu0 0.0
    %1806 = vmatprep.subr.mxu0 0.0
    %1807 = vmatpush2.msra.mxu0 0.0
    %1808 = vmatprep.subr.mxu0 0.0
    %1809 = vmatpush2.msra.mxu0 0.0
    %1810 = vmatprep.subr.mxu0 0.0
    %1811 = vmatpush2.msra.mxu0 0.0
    %1812 = vmatprep.subr.mxu0 0.0
    %1813 = vmatpush2.msra.mxu0 0.0
    %1814 = vmatprep.subr.mxu0 0.0
    %1815 = vmatpush2.msra.mxu0 0.0
    %1816 = vmatprep.subr.mxu0 0.0
    %1817 = vmatpush2.msra.mxu0 0.0
    %1818 = vmatprep.subr.mxu0 0.0
    %1819 = vmatpush2.msra.mxu0 0.0
    %1820 = vmatprep.subr.mxu0 0.0
    %1821 = vmatpush2.msra.mxu0 0.0
    %1822 = vmatprep.subr.mxu0 0.0
    %1823 = vmatpush2.msra.mxu0 0.0
    %1824 = vmatprep.subr.mxu0 0.0
    %1825 = vmatpush2.msra.mxu0 0.0
    %1826 = vmatprep.mubr.f32.mxu0 0.0
    %1827 = vmatmul.mubr.f32.gmra.mxu0 %v1760
    %v1828 = vpop.f32.mrf.mxu0
    %v1829 = vadd.f32 0.0, %v1828
    %v1830 = vpop.f32.mrf.mxu0
    %1831 = vdwg.mxu0
    %v1832 = vlaneseq
    %v1833 = vshrl.u32 %v1832, 7
    %v1834 = vsub.s32 0, %v1833
    %v1835 = vrot.slane %v1756, %v1834
    %v1836 = vmul.f32 %v1457, %v1835
    %v1837 = vmul.f32 %v1462, %v1835
    %v1838 = vmul.f32 %v1467, %v1835
    %v1839 = vmul.f32 %v1472, %v1835
    %v1840 = vlaneseq
    %v1841 = vshrl.u32 %v1840, 7
    %v1842 = vsub.s32 0, %v1841
    %v1843 = vrot.slane %v1829, %v1842
    %v1844 = vadd.f32 %v1836, %v1843
    %v1845 = vadd.f32 %v1837, %v1843
    %v1846 = vadd.f32 %v1838, %v1843
    %v1847 = vadd.f32 %v1839, %v1843
    %v1848 = vadd.f32 %v1361, %v1844
    %v1849 = vadd.f32 %v1362, %v1845
    %v1850 = vadd.f32 %v1363, %v1846
    %v1851 = vadd.f32 %v1364, %v1847
    %v1852 = vmax.f32 %v1848, 0.0
    %v1853 = vmax.f32 %v1849, 0.0
    %v1854 = vmax.f32 %v1850, 0.0
    %v1855 = vmax.f32 %v1851, 0.0
    %1856 = vst [vmem:[#allocation7] sm:$0xff] %v1852
    %1857 = vst [vmem:[#allocation7 + $0x8] sm:$0xff] %v1853
    %1858 = vst [vmem:[#allocation7 + $0x10] sm:$0xff] %v1854
    %1859 = vst [vmem:[#allocation7 + $0x18] sm:$0xff] %v1855
    // Predicated region
    $region70: #{tpu_custom_call.1} parent=1 // pred_check
      _
    $region71: #{tpu_custom_call.1} parent=1 // pred_check_branch
      %1861 = sbr.rel (0) target = $region73
    $region72: #{tpu_custom_call.1} parent=1 // pred_region
      %s1863 = ssub.s32 512, 512
      %1864 = vsyncadd [#allocation4], %s1863
      %s1865 = sshll.u32 [#allocation7], 4
      %s1866 = int_to_ptr.vmem [resolvable:$true] %s1865
      %1871 = dma.vmem_to_hbm [thread:$0]  %s1866, 512, %s15, [#allocation4], 128, 128, 8
    $region73: #{tpu_custom_call.1} parent=1 // pred_fallthru
      _
    // Predicated region
    $region74: #{tpu_custom_call.1} parent=1 // pred_check
      _
    $region75: #{tpu_custom_call.1} parent=1 // pred_check_branch
      %1873 = sbr.rel (0) target = $region77
    $region76: #{tpu_custom_call.1} parent=1 // pred_region
      %1874 = dma.done [#allocation4], 512
    $region77: #{tpu_custom_call.1} parent=1 // pred_fallthru
      _
    %1875 = vsyncpa [#allocation3], 1
    %1876 = vsyncpa [#allocation6], 1
    %1877 = vsyncpa [#allocation4], 1

</llo_original>
